<compile_context>
chip_gen: v6e
topology: v6e:2x2x1
jax: 0.10.0
libtpu: 0.0.40
codegen_flags: <defaults>
</compile_context>

<pallas_src>
import jax
import jax.numpy as jnp
from jax import lax
from jax.experimental import pallas as pl
from jax.experimental.pallas import tpu as pltpu


def _round_up(x, m):
    return (x + m - 1) // m * m


def _make_kernel(D, H, W, WP, WL):
    """Fused per-depth-plane kernel.

    Grid is (B, D+3).  Step s fetches the original depth plane holding the
    reflect-padded plane Rp[s] (Rp has D+2 planes; s == D+2 is a dummy fetch).
    Boundary output depth d = s-1 needs the zero-bordered reflect planes
    Zp[d-1], Zp[d], Zp[d+1], which live in a 3-slot rotating VMEM buffer
    (slot = step mod 3).  Dice/CE/Tversky stats accumulate once per original
    plane (1 <= s <= D).  Everything is reduced in-kernel to per-batch rows.
    """
    Hp2, Wp2 = H + 2, W + 2
    LAST = D + 2

    def kernel(x_ref, t_ref, acc_ref, p_buf, t_buf):
        s = pl.program_id(1)
        cur = lax.rem(s, 3)          # slot being (re)written this step  -> Zp[s]
        prev1 = lax.rem(s + 2, 3)    # slot holding Zp[s-1]
        prev2 = lax.rem(s + 1, 3)    # slot holding Zp[s-2] (zeros at s == 1)

        # ------------------------------------------------------------------ init
        @pl.when(s == 0)
        def _init():
            acc_ref[...] = jnp.zeros_like(acc_ref)
            p_buf[...] = jnp.zeros_like(p_buf)
            t_buf[...] = jnp.zeros_like(t_buf)

        # ----------------------------------------------- per-voxel pointwise math
        x = x_ref[...].astype(jnp.float32)                       # (2, H, W)
        x0 = x[0]
        x1 = x[1]
        tgt = (t_ref[...].astype(jnp.float32) > 0.0).astype(jnp.float32)

        m = x1 - x0                                              # class-1 logit margin
        e = jnp.exp(-jnp.abs(m))                                 # in (0, 1]
        softplus = jnp.log(1.0 + e) + jnp.maximum(m, 0.0)        # softplus(m)
        ce = softplus - tgt * m                                  # -(t*logp1 + (1-t)*logp0)
        p1 = jnp.exp(m - softplus)                               # sigmoid(m) == softmax(x)[1]

        # -------------------------------------- accumulator row-update helper
        def acc_row(idx, row):                                   # row: (1, w), w <= WL
            w = row.shape[1]
            if w < WL:
                row = jnp.concatenate(
                    [row, jnp.zeros((1, WL - w), jnp.float32)], axis=1)
            acc_ref[idx:idx + 1, :] += row

        # --------------- dice / CE / focal-tversky partial sums (once per plane)
        @pl.when(jnp.logical_and(s >= 1, s <= D))
        def _stats():
            acc_row(0, jnp.sum(p1 * tgt, axis=0, keepdims=True))
            acc_row(1, jnp.sum(p1, axis=0, keepdims=True))
            acc_row(2, jnp.sum(tgt, axis=0, keepdims=True))
            acc_row(3, jnp.sum(ce, axis=0, keepdims=True))

        # ---- build the zero-bordered, reflect-padded plane Zp[s] as ONE value and
        # ---- store it with a single aligned full-slot write.
        def make_plane(src):                                     # (H, W) -> (H+4, WP)
            rows = jnp.concatenate(
                [src[1:2, :], src, src[H - 2:H - 1, :]], axis=0)  # reflect in H: (H+2, W)
            body = jnp.concatenate(
                [jnp.zeros((Hp2, 1), jnp.float32),                # conv zero pad (col 0)
                 rows[:, 1:2],                                    # reflect col
                 rows,
                 rows[:, W - 2:W - 1],                            # reflect col
                 jnp.zeros((Hp2, WP - (W + 3)), jnp.float32)],    # zero pad + lane pad
                axis=1)                                           # (H+2, WP)
            zrow = jnp.zeros((1, WP), jnp.float32)
            return jnp.concatenate([zrow, body, zrow], axis=0)    # (H+4, WP)

        @pl.when(s <= D + 1)
        def _build():
            p_buf[cur] = make_plane(p1)
            t_buf[cur] = make_plane(tgt)

        @pl.when(s == LAST)                       # Zp beyond the padded volume is zero
        def _zero_tail():
            zero = jnp.zeros((H + 4, WP), jnp.float32)
            p_buf[cur] = zero
            t_buf[cur] = zero

        # -------------- Sobel boundary squared-error for output depth plane d = s-1
        @pl.when(s >= 1)
        def _boundary():
            def grad_mag(zm2, zm1, zcur):
                # zm1 holds Zp[d] (centre plane), zm2 -> Zp[d-1], zcur -> Zp[d+1]
                c0 = zm1[:, 0:Wp2]                     # Zp[:, w]
                c1 = zm1[:, 1:Wp2 + 1]                 # Zp[:, w+1]
                c2 = zm1[:, 2:Wp2 + 2]                 # Zp[:, w+2]
                hd = c0 - c2                           # horizontal diff   [1, 0, -1]
                hs = c0 + 2.0 * c1 + c2                # horizontal smooth [1, 2,  1]
                gx = hd[0:Hp2] + 2.0 * hd[1:Hp2 + 1] + hd[2:Hp2 + 2]
                gy = hs[0:Hp2] - hs[2:Hp2 + 2]
                gz = (zm2[1:Hp2 + 1, 1:Wp2 + 1] - zcur[1:Hp2 + 1, 1:Wp2 + 1]
                      + c1[0:Hp2] + c0[1:Hp2 + 1] + 2.0 * c1[1:Hp2 + 1]
                      + c2[1:Hp2 + 1] + c1[2:Hp2 + 2])
                return (jnp.abs(gx) + jnp.abs(gy) + jnp.abs(gz)) * (1.0 / 3.0)

            gp = grad_mag(p_buf[prev2], p_buf[prev1], p_buf[cur])
            gt = grad_mag(t_buf[prev2], t_buf[prev1], t_buf[cur])
            diff = gp - gt
            acc_row(4, jnp.sum(diff * diff, axis=0, keepdims=True))

    return kernel


def dc_and_bce_loss(net_output, target):
    """Forward of DC_and_BCE_loss. net_output: (B, 2, D, H, W); target: (B, D, H, W)."""
    B, C, D, H, W = net_output.shape
    assert C == 2, "this kernel implements the binary (C == 2) case"
    assert D >= 2 and H >= 2 and W >= 2, "reflect padding needs spatial dims >= 2"

    smooth = 1e-5
    alpha, beta, gamma = 0.3, 0.7, 0.75
    w_ce, w_dice, w_boundary, w_ftl = 0.5, 1.0, 0.3, 0.3

    WP = _round_up(W + 4, 128)      # lane-aligned padded-plane width (halo scratch)
    WL = _round_up(W + 2, 128)      # lane width of the per-batch accumulator rows
    S = D + 3                       # warm-up plane + D+2 boundary output planes

    def plane_idx(s):
        # original depth plane that holds reflect-padded plane Rp[s]
        return jnp.where(s == 0, 1,
               jnp.where(s <= D, s - 1,
               jnp.where(s == D + 1, D - 2, 0)))     # s == D+2: dummy fetch

    kernel = _make_kernel(D, H, W, WP, WL)

    # resident VMEM estimate: 2 rotating halo buffers + double-buffered in/out blocks
    itemsize = jnp.dtype(net_output.dtype).itemsize
    vmem_bytes = int(2 * 3 * (H + 4) * WP * 4
                     + 2 * (2 * H * W + H * W) * itemsize * 2
                     + 2 * 8 * WL * 4
                     + (16 << 20))
    vmem_bytes = max(32 << 20, min(vmem_bytes, 100 << 20))

    acc = pl.pallas_call(
        kernel,
        out_shape=jax.ShapeDtypeStruct((B, 8, WL), jnp.float32),
        grid=(B, S),
        in_specs=[
            # both logit channels through one stream (single DMA descriptor per step)
            pl.BlockSpec((None, 2, None, H, W),
                         lambda b, s: (b, 0, plane_idx(s), 0, 0)),
            pl.BlockSpec((None, None, H, W),
                         lambda b, s: (b, plane_idx(s), 0, 0)),
        ],
        out_specs=pl.BlockSpec((None, 8, WL), lambda b, s: (b, 0, 0)),
        scratch_shapes=[pltpu.VMEM((3, H + 4, WP), jnp.float32),   # p halo (rotating)
                        pltpu.VMEM((3, H + 4, WP), jnp.float32)],  # t halo (rotating)
        compiler_params=pltpu.CompilerParams(
            dimension_semantics=("parallel", "arbitrary"),
            vmem_limit_bytes=vmem_bytes),
    )(net_output, target)

    # ---------------- tiny JAX glue: finish the lane sums and combine the losses ----
    tp = jnp.sum(acc[:, 0, :], axis=-1)          # sum p1 * t   per batch
    ps = jnp.sum(acc[:, 1, :], axis=-1)          # sum p1       per batch
    ts = jnp.sum(acc[:, 2, :], axis=-1)          # sum t        per batch
    ce_sum = jnp.sum(acc[:, 3, :], axis=-1)      # sum ce       per batch
    bnd_sum = jnp.sum(acc[:, 4, :])              # sum (grad_p - grad_t)^2 (all batches)

    fp = ps - tp                                 # sum p1 * (1 - t)
    fn = ts - tp                                 # sum (1 - p1) * t

    # SoftDiceLoss (per-sample dice for class 1, then mean -- as in the reference code)
    dice = (2.0 * tp + smooth) / (2.0 * tp + fp + fn + smooth)
    dc_loss = jnp.mean(1.0 - dice)

    # RobustCrossEntropyLoss (mean over (B, D, H, W))
    ce_loss = jnp.sum(ce_sum) / (B * D * H * W)

    # FocalTverskyLoss
    tversky = (tp + smooth) / (tp + alpha * fp + beta * fn + smooth)
    ftl_loss = jnp.mean(jnp.power(jnp.maximum(1.0 - tversky, 0.0), gamma))

    # BoundaryLoss: F.mse_loss over the (B, 1, D+2, H+2, W+2) gradient tensors
    boundary_loss = bnd_sum / (B * (D + 2) * (H + 2) * (W + 2))

    return (w_ce * ce_loss + w_dice * dc_loss
            + w_boundary * boundary_loss + w_ftl * ftl_loss)


# ------------------------------ pure-JAX reference (for a correctness check) ---------
def _reference_loss(net_output, target):
    B, C, D, H, W = net_output.shape
    xf = net_output.astype(jnp.float32)
    p1 = jax.nn.softmax(xf, axis=1)[:, 1]                       # (B, D, H, W)
    t = (target > 0).astype(jnp.float32)

    smooth = 1e-5
    tp = jnp.sum(p1 * t, axis=(1, 2, 3))
    ps = jnp.sum(p1, axis=(1, 2, 3))
    ts = jnp.sum(t, axis=(1, 2, 3))
    fp = ps - tp
    fn = ts - tp
    dice = (2.0 * tp + smooth) / (2.0 * tp + fp + fn + smooth)
    dc_loss = jnp.mean(1.0 - dice)
    tversky = (tp + smooth) / (tp + 0.3 * fp + 0.7 * fn + smooth)
    ftl_loss = jnp.mean((1.0 - tversky) ** 0.75)

    logp = jax.nn.log_softmax(xf, axis=1)
    ce_loss = jnp.mean(-(t * logp[:, 1] + (1.0 - t) * logp[:, 0]))

    def grad(x):                                                 # x: (B, 1, D, H, W)
        xp = jnp.pad(x, ((0, 0), (0, 0), (1, 1), (1, 1), (1, 1)), mode="reflect")
        kx = jnp.array([[[1., 0., -1.], [2., 0., -2.], [1., 0., -1.]]])
        ky = jnp.array([[[1., 2., 1.], [0., 0., 0.], [-1., -2., -1.]]])
        kz = jnp.array([[[0., 0., 0.], [0., 1., 0.], [0., 0., 0.]],
                        [[0., 1., 0.], [1., 2., 1.], [0., 1., 0.]],
                        [[0., 0., 0.], [0., -1., 0.], [0., 0., 0.]]])

        def conv(inp, k, pad):
            return lax.conv_general_dilated(
                inp, k[None, None], window_strides=(1, 1, 1), padding=pad,
                dimension_numbers=("NCDHW", "OIDHW", "NCDHW"))

        gx = jnp.abs(conv(xp, kx, [(0, 0), (1, 1), (1, 1)]))
        gy = jnp.abs(conv(xp, ky, [(0, 0), (1, 1), (1, 1)]))
        gz = jnp.abs(conv(xp, kz, [(1, 1), (1, 1), (1, 1)]))
        return (gx + gy + gz) / 3.0

    gp = grad(p1[:, None])
    gt = grad(t[:, None])
    boundary_loss = jnp.mean((gp - gt) ** 2)

    return 0.5 * ce_loss + 1.0 * dc_loss + 0.3 * boundary_loss + 0.3 * ftl_loss


if __name__ == "__main__":
    # DC_and_BCE_loss has no learnable parameters; only deterministic inputs needed.
    key = jax.random.PRNGKey(0)
    k1, k2 = jax.random.split(key)
    B, C, D, H, W = 2, 2, 8, 16, 16
    net_output = jax.random.normal(k1, (B, C, D, H, W), dtype=jnp.float32)
    target = (jax.random.uniform(k2, (B, D, H, W)) > 0.7).astype(jnp.float32)

    loss = jax.jit(dc_and_bce_loss)(net_output, target)
    loss = jax.block_until_ready(loss)
    assert jnp.isfinite(loss), f"non-finite loss: {loss}"

    ref = jax.block_until_ready(jax.jit(_reference_loss)(net_output, target))
    assert jnp.allclose(loss, ref, rtol=1e-3, atol=1e-3), (float(loss), float(ref))

    print("KERNEL_OK")
</pallas_src>

<mosaic_0001>
module attributes {stable_mosaic.version = 11 : i64} {
  func.func @kernel(%arg0: i32, %arg1: i32, %arg2: memref<1x2x1x16x16xf32, #tpu.memory_space<vmem>>, %arg3: memref<1x1x16x16xf32, #tpu.memory_space<vmem>>, %arg4: memref<1x8x128xf32, #tpu.memory_space<vmem>>, %arg5: memref<3x20x128xf32, #tpu.memory_space<vmem>>, %arg6: memref<3x20x128xf32, #tpu.memory_space<vmem>>) attributes {dimension_semantics = [#tpu.dimension_semantics<parallel>, #tpu.dimension_semantics<arbitrary>], iteration_bounds = array<i64: 2, 11>, scalar_prefetch = 0 : i64, scratch_operands = 2 : i64, tpu.core_type = #tpu.core_type<tc>, window_params = [{transform_indices = @transform_0, window_bounds = array<i64: 1, 2, 1, 16, 16>}, {transform_indices = @transform_1, window_bounds = array<i64: 1, 1, 16, 16>}, {transform_indices = @transform_2, window_bounds = array<i64: 1, 8, 128>}]} {
    %c3_i32 = arith.constant 3 : i32
    %0 = arith.remsi %arg1, %c3_i32 : i32
    %c2_i32 = arith.constant 2 : i32
    %1 = arith.addi %arg1, %c2_i32 : i32
    %c3_i32_0 = arith.constant 3 : i32
    %2 = arith.remsi %1, %c3_i32_0 : i32
    %c1_i32 = arith.constant 1 : i32
    %3 = arith.addi %arg1, %c1_i32 : i32
    %c3_i32_1 = arith.constant 3 : i32
    %4 = arith.remsi %3, %c3_i32_1 : i32
    %c0_i32 = arith.constant 0 : i32
    %5 = arith.cmpi eq, %arg1, %c0_i32 : i32
    %6 = arith.extui %5 : i1 to i32
    %c0_i32_2 = arith.constant 0 : i32
    %7 = arith.cmpi ne, %6, %c0_i32_2 : i32
    scf.if %7 {
      %cst_20 = arith.constant 0.000000e+00 : f32
      %49 = vector.broadcast %cst_20 : f32 to vector<8x128xf32>
      %c0_21 = arith.constant 0 : index
      %c0_22 = arith.constant 0 : index
      %c0_23 = arith.constant 0 : index
      %50 = vector.load %arg4[%c0_21, %c0_22, %c0_23] : memref<1x8x128xf32, #tpu.memory_space<vmem>>, vector<1x8x128xf32>
      %51 = vector.shape_cast %50 : vector<1x8x128xf32> to vector<8x128xf32>
      %52 = vector.shape_cast %49 : vector<8x128xf32> to vector<1x8x128xf32>
      tpu.vector_store %arg4[%c0_21, %c0_22, %c0_23], %52 {strides = array<i32>} : memref<1x8x128xf32, #tpu.memory_space<vmem>>, vector<1x8x128xf32>,
      %cst_24 = arith.constant 0.000000e+00 : f32
      %53 = vector.broadcast %cst_24 : f32 to vector<3x20x128xf32>
      %c0_25 = arith.constant 0 : index
      %c0_26 = arith.constant 0 : index
      %c0_27 = arith.constant 0 : index
      %54 = vector.load %arg5[%c0_25, %c0_26, %c0_27] : memref<3x20x128xf32, #tpu.memory_space<vmem>>, vector<3x20x128xf32>
      tpu.vector_store %arg5[%c0_25, %c0_26, %c0_27], %53 {strides = array<i32>} : memref<3x20x128xf32, #tpu.memory_space<vmem>>, vector<3x20x128xf32>,
      %cst_28 = arith.constant 0.000000e+00 : f32
      %55 = vector.broadcast %cst_28 : f32 to vector<3x20x128xf32>
      %c0_29 = arith.constant 0 : index
      %c0_30 = arith.constant 0 : index
      %c0_31 = arith.constant 0 : index
      %56 = vector.load %arg6[%c0_29, %c0_30, %c0_31] : memref<3x20x128xf32, #tpu.memory_space<vmem>>, vector<3x20x128xf32>
      tpu.vector_store %arg6[%c0_29, %c0_30, %c0_31], %55 {strides = array<i32>} : memref<3x20x128xf32, #tpu.memory_space<vmem>>, vector<3x20x128xf32>,
    } else {
    }
    %c0 = arith.constant 0 : index
    %c0_3 = arith.constant 0 : index
    %c0_4 = arith.constant 0 : index
    %c0_5 = arith.constant 0 : index
    %c0_6 = arith.constant 0 : index
    %8 = vector.load %arg2[%c0, %c0_3, %c0_4, %c0_5, %c0_6] : memref<1x2x1x16x16xf32, #tpu.memory_space<vmem>>, vector<1x2x1x16x16xf32>
    %9 = vector.shape_cast %8 : vector<1x2x1x16x16xf32> to vector<2x16x16xf32>
    %10 = vector.extract_strided_slice %9 {offsets = [0, 0, 0], sizes = [1, 16, 16], strides = [1, 1, 1]} : vector<2x16x16xf32> to vector<1x16x16xf32>
    %11 = vector.shape_cast %10 : vector<1x16x16xf32> to vector<16x16xf32>
    %12 = vector.extract_strided_slice %9 {offsets = [1, 0, 0], sizes = [1, 16, 16], strides = [1, 1, 1]} : vector<2x16x16xf32> to vector<1x16x16xf32>
    %13 = vector.shape_cast %12 : vector<1x16x16xf32> to vector<16x16xf32>
    %c0_7 = arith.constant 0 : index
    %c0_8 = arith.constant 0 : index
    %c0_9 = arith.constant 0 : index
    %c0_10 = arith.constant 0 : index
    %14 = vector.load %arg3[%c0_7, %c0_8, %c0_9, %c0_10] : memref<1x1x16x16xf32, #tpu.memory_space<vmem>>, vector<1x1x16x16xf32>
    %15 = vector.shape_cast %14 : vector<1x1x16x16xf32> to vector<16x16xf32>
    %cst = arith.constant 0.000000e+00 : f32
    %16 = vector.broadcast %cst : f32 to vector<16x16xf32>
    %17 = arith.cmpf ogt, %15, %16 : vector<16x16xf32>
    %18 = arith.extui %17 : vector<16x16xi1> to vector<16x16xi32>
    %19 = arith.sitofp %18 : vector<16x16xi32> to vector<16x16xf32>
    %20 = arith.subf %13, %11 : vector<16x16xf32>
    %21 = math.absf %20 : vector<16x16xf32>
    %cst_11 = arith.constant 0.000000e+00 : f32
    %22 = vector.broadcast %cst_11 : f32 to vector<16x16xf32>
    %23 = arith.subf %22, %21 : vector<16x16xf32>
    %24 = math.exp %23 : vector<16x16xf32>
    %cst_12 = arith.constant 1.000000e+00 : f32
    %25 = vector.broadcast %cst_12 : f32 to vector<16x16xf32>
    %26 = arith.addf %25, %24 : vector<16x16xf32>
    %27 = math.log %26 : vector<16x16xf32>
    %cst_13 = arith.constant 0.000000e+00 : f32
    %28 = vector.broadcast %cst_13 : f32 to vector<16x16xf32>
    %29 = arith.maximumf %20, %28 : vector<16x16xf32>
    %30 = arith.addf %27, %29 : vector<16x16xf32>
    %31 = arith.mulf %19, %20 : vector<16x16xf32>
    %32 = arith.subf %30, %31 : vector<16x16xf32>
    %33 = arith.subf %20, %30 : vector<16x16xf32>
    %34 = math.exp %33 : vector<16x16xf32>
    %c1_i32_14 = arith.constant 1 : i32
    %35 = arith.cmpi sge, %arg1, %c1_i32_14 : i32
    %c8_i32 = arith.constant 8 : i32
    %36 = arith.cmpi sle, %arg1, %c8_i32 : i32
    %37 = arith.andi %35, %36 : i1
    %38 = arith.extui %37 : i1 to i32
    %c0_i32_15 = arith.constant 0 : i32
    %39 = arith.cmpi ne, %38, %c0_i32_15 : i32
    scf.if %39 {
      %49 = arith.mulf %34, %19 : vector<16x16xf32>
      %cst_20 = arith.constant dense<0.000000e+00> : vector<16xf32>
      %50 = vector.multi_reduction <add>, %49, %cst_20 [0] : vector<16x16xf32> to vector<16xf32>
      %51 = vector.shape_cast %50 : vector<16xf32> to vector<1x16xf32>
      %cst_21 = arith.constant 0.000000e+00 : f32
      %52 = vector.broadcast %cst_21 : f32 to vector<1x112xf32>
      %53 = tpu.concatenate %51, %52 in 1 : vector<1x16xf32>, vector<1x112xf32> -> vector<1x128xf32>
      %c0_22 = arith.constant 0 : index
      %c0_23 = arith.constant 0 : index
      %c0_24 = arith.constant 0 : index
      %54 = vector.load %arg4[%c0_22, %c0_23, %c0_24] : memref<1x8x128xf32, #tpu.memory_space<vmem>>, vector<1x1x128xf32>
      %55 = vector.shape_cast %54 : vector<1x1x128xf32> to vector<1x128xf32>
      %56 = arith.addf %55, %53 : vector<1x128xf32>
      %c0_25 = arith.constant 0 : index
      %c0_26 = arith.constant 0 : index
      %c0_27 = arith.constant 0 : index
      %57 = vector.load %arg4[%c0_25, %c0_26, %c0_27] : memref<1x8x128xf32, #tpu.memory_space<vmem>>, vector<1x1x128xf32>
      %58 = vector.shape_cast %57 : vector<1x1x128xf32> to vector<1x128xf32>
      %59 = vector.shape_cast %56 : vector<1x128xf32> to vector<1x1x128xf32>
      tpu.vector_store %arg4[%c0_25, %c0_26, %c0_27], %59 {strides = array<i32>} : memref<1x8x128xf32, #tpu.memory_space<vmem>>, vector<1x1x128xf32>,
      %cst_28 = arith.constant dense<0.000000e+00> : vector<16xf32>
      %60 = vector.multi_reduction <add>, %34, %cst_28 [0] : vector<16x16xf32> to vector<16xf32>
      %61 = vector.shape_cast %60 : vector<16xf32> to vector<1x16xf32>
      %cst_29 = arith.constant 0.000000e+00 : f32
      %62 = vector.broadcast %cst_29 : f32 to vector<1x112xf32>
      %63 = tpu.concatenate %61, %62 in 1 : vector<1x16xf32>, vector<1x112xf32> -> vector<1x128xf32>
      %c0_30 = arith.constant 0 : index
      %c1 = arith.constant 1 : index
      %c0_31 = arith.constant 0 : index
      %64 = vector.load %arg4[%c0_30, %c1, %c0_31] : memref<1x8x128xf32, #tpu.memory_space<vmem>>, vector<1x1x128xf32>
      %65 = vector.shape_cast %64 : vector<1x1x128xf32> to vector<1x128xf32>
      %66 = arith.addf %65, %63 : vector<1x128xf32>
      %c0_32 = arith.constant 0 : index
      %c1_33 = arith.constant 1 : index
      %c0_34 = arith.constant 0 : index
      %67 = vector.load %arg4[%c0_32, %c1_33, %c0_34] : memref<1x8x128xf32, #tpu.memory_space<vmem>>, vector<1x1x128xf32>
      %68 = vector.shape_cast %67 : vector<1x1x128xf32> to vector<1x128xf32>
      %69 = vector.shape_cast %66 : vector<1x128xf32> to vector<1x1x128xf32>
      tpu.vector_store %arg4[%c0_32, %c1_33, %c0_34], %69 {strides = array<i32>} : memref<1x8x128xf32, #tpu.memory_space<vmem>>, vector<1x1x128xf32>,
      %cst_35 = arith.constant dense<0.000000e+00> : vector<16xf32>
      %70 = vector.multi_reduction <add>, %19, %cst_35 [0] : vector<16x16xf32> to vector<16xf32>
      %71 = vector.shape_cast %70 : vector<16xf32> to vector<1x16xf32>
      %cst_36 = arith.constant 0.000000e+00 : f32
      %72 = vector.broadcast %cst_36 : f32 to vector<1x112xf32>
      %73 = tpu.concatenate %71, %72 in 1 : vector<1x16xf32>, vector<1x112xf32> -> vector<1x128xf32>
      %c0_37 = arith.constant 0 : index
      %c2 = arith.constant 2 : index
      %c0_38 = arith.constant 0 : index
      %74 = vector.load %arg4[%c0_37, %c2, %c0_38] : memref<1x8x128xf32, #tpu.memory_space<vmem>>, vector<1x1x128xf32>
      %75 = vector.shape_cast %74 : vector<1x1x128xf32> to vector<1x128xf32>
      %76 = arith.addf %75, %73 : vector<1x128xf32>
      %c0_39 = arith.constant 0 : index
      %c2_40 = arith.constant 2 : index
      %c0_41 = arith.constant 0 : index
      %77 = vector.load %arg4[%c0_39, %c2_40, %c0_41] : memref<1x8x128xf32, #tpu.memory_space<vmem>>, vector<1x1x128xf32>
      %78 = vector.shape_cast %77 : vector<1x1x128xf32> to vector<1x128xf32>
      %79 = vector.shape_cast %76 : vector<1x128xf32> to vector<1x1x128xf32>
      tpu.vector_store %arg4[%c0_39, %c2_40, %c0_41], %79 {strides = array<i32>} : memref<1x8x128xf32, #tpu.memory_space<vmem>>, vector<1x1x128xf32>,
      %cst_42 = arith.constant dense<0.000000e+00> : vector<16xf32>
      %80 = vector.multi_reduction <add>, %32, %cst_42 [0] : vector<16x16xf32> to vector<16xf32>
      %81 = vector.shape_cast %80 : vector<16xf32> to vector<1x16xf32>
      %cst_43 = arith.constant 0.000000e+00 : f32
      %82 = vector.broadcast %cst_43 : f32 to vector<1x112xf32>
      %83 = tpu.concatenate %81, %82 in 1 : vector<1x16xf32>, vector<1x112xf32> -> vector<1x128xf32>
      %c0_44 = arith.constant 0 : index
      %c3 = arith.constant 3 : index
      %c0_45 = arith.constant 0 : index
      %84 = vector.load %arg4[%c0_44, %c3, %c0_45] : memref<1x8x128xf32, #tpu.memory_space<vmem>>, vector<1x1x128xf32>
      %85 = vector.shape_cast %84 : vector<1x1x128xf32> to vector<1x128xf32>
      %86 = arith.addf %85, %83 : vector<1x128xf32>
      %c0_46 = arith.constant 0 : index
      %c3_47 = arith.constant 3 : index
      %c0_48 = arith.constant 0 : index
      %87 = vector.load %arg4[%c0_46, %c3_47, %c0_48] : memref<1x8x128xf32, #tpu.memory_space<vmem>>, vector<1x1x128xf32>
      %88 = vector.shape_cast %87 : vector<1x1x128xf32> to vector<1x128xf32>
      %89 = vector.shape_cast %86 : vector<1x128xf32> to vector<1x1x128xf32>
      tpu.vector_store %arg4[%c0_46, %c3_47, %c0_48], %89 {strides = array<i32>} : memref<1x8x128xf32, #tpu.memory_space<vmem>>, vector<1x1x128xf32>,
    } else {
    }
    %c9_i32 = arith.constant 9 : i32
    %40 = arith.cmpi sle, %arg1, %c9_i32 : i32
    %41 = arith.extui %40 : i1 to i32
    %c0_i32_16 = arith.constant 0 : i32
    %42 = arith.cmpi ne, %41, %c0_i32_16 : i32
    scf.if %42 {
      %49 = vector.extract_strided_slice %34 {offsets = [1, 0], sizes = [1, 16], strides = [1, 1]} : vector<16x16xf32> to vector<1x16xf32>
      %50 = vector.extract_strided_slice %34 {offsets = [14, 0], sizes = [1, 16], strides = [1, 1]} : vector<16x16xf32> to vector<1x16xf32>
      %51 = tpu.concatenate %49, %34, %50 in 0 : vector<1x16xf32>, vector<16x16xf32>, vector<1x16xf32> -> vector<18x16xf32>
      %cst_20 = arith.constant 0.000000e+00 : f32
      %52 = vector.broadcast %cst_20 : f32 to vector<18x1xf32>
      %53 = vector.extract_strided_slice %51 {offsets = [0, 1], sizes = [18, 1], strides = [1, 1]} : vector<18x16xf32> to vector<18x1xf32>
      %54 = vector.extract_strided_slice %51 {offsets = [0, 14], sizes = [18, 1], strides = [1, 1]} : vector<18x16xf32> to vector<18x1xf32>
      %cst_21 = arith.constant 0.000000e+00 : f32
      %55 = vector.broadcast %cst_21 : f32 to vector<18x109xf32>
      %56 = tpu.concatenate %52, %53, %51, %54, %55 in 1 : vector<18x1xf32>, vector<18x1xf32>, vector<18x16xf32>, vector<18x1xf32>, vector<18x109xf32> -> vector<18x128xf32>
      %cst_22 = arith.constant 0.000000e+00 : f32
      %57 = vector.broadcast %cst_22 : f32 to vector<1x128xf32>
      %58 = tpu.concatenate %57, %56, %57 in 0 : vector<1x128xf32>, vector<18x128xf32>, vector<1x128xf32> -> vector<20x128xf32>
      %59 = arith.index_cast %0 : i32 to index
      %c0_23 = arith.constant 0 : index
      %c0_24 = arith.constant 0 : index
      %60 = vector.load %arg5[%59, %c0_23, %c0_24] : memref<3x20x128xf32, #tpu.memory_space<vmem>>, vector<1x20x128xf32>
      %61 = vector.shape_cast %60 : vector<1x20x128xf32> to vector<20x128xf32>
      %62 = vector.shape_cast %58 : vector<20x128xf32> to vector<1x20x128xf32>
      tpu.vector_store %arg5[%59, %c0_23, %c0_24], %62 {strides = array<i32>} : memref<3x20x128xf32, #tpu.memory_space<vmem>>, vector<1x20x128xf32>,
      %63 = vector.extract_strided_slice %19 {offsets = [1, 0], sizes = [1, 16], strides = [1, 1]} : vector<16x16xf32> to vector<1x16xf32>
      %64 = vector.extract_strided_slice %19 {offsets = [14, 0], sizes = [1, 16], strides = [1, 1]} : vector<16x16xf32> to vector<1x16xf32>
      %65 = tpu.concatenate %63, %19, %64 in 0 : vector<1x16xf32>, vector<16x16xf32>, vector<1x16xf32> -> vector<18x16xf32>
      %cst_25 = arith.constant 0.000000e+00 : f32
      %66 = vector.broadcast %cst_25 : f32 to vector<18x1xf32>
      %67 = vector.extract_strided_slice %65 {offsets = [0, 1], sizes = [18, 1], strides = [1, 1]} : vector<18x16xf32> to vector<18x1xf32>
      %68 = vector.extract_strided_slice %65 {offsets = [0, 14], sizes = [18, 1], strides = [1, 1]} : vector<18x16xf32> to vector<18x1xf32>
      %cst_26 = arith.constant 0.000000e+00 : f32
      %69 = vector.broadcast %cst_26 : f32 to vector<18x109xf32>
      %70 = tpu.concatenate %66, %67, %65, %68, %69 in 1 : vector<18x1xf32>, vector<18x1xf32>, vector<18x16xf32>, vector<18x1xf32>, vector<18x109xf32> -> vector<18x128xf32>
      %cst_27 = arith.constant 0.000000e+00 : f32
      %71 = vector.broadcast %cst_27 : f32 to vector<1x128xf32>
      %72 = tpu.concatenate %71, %70, %71 in 0 : vector<1x128xf32>, vector<18x128xf32>, vector<1x128xf32> -> vector<20x128xf32>
      %73 = arith.index_cast %0 : i32 to index
      %c0_28 = arith.constant 0 : index
      %c0_29 = arith.constant 0 : index
      %74 = vector.load %arg6[%73, %c0_28, %c0_29] : memref<3x20x128xf32, #tpu.memory_space<vmem>>, vector<1x20x128xf32>
      %75 = vector.shape_cast %74 : vector<1x20x128xf32> to vector<20x128xf32>
      %76 = vector.shape_cast %72 : vector<20x128xf32> to vector<1x20x128xf32>
      tpu.vector_store %arg6[%73, %c0_28, %c0_29], %76 {strides = array<i32>} : memref<3x20x128xf32, #tpu.memory_space<vmem>>, vector<1x20x128xf32>,
    } else {
    }
    %c10_i32 = arith.constant 10 : i32
    %43 = arith.cmpi eq, %arg1, %c10_i32 : i32
    %44 = arith.extui %43 : i1 to i32
    %c0_i32_17 = arith.constant 0 : i32
    %45 = arith.cmpi ne, %44, %c0_i32_17 : i32
    scf.if %45 {
      %cst_20 = arith.constant 0.000000e+00 : f32
      %49 = vector.broadcast %cst_20 : f32 to vector<20x128xf32>
      %50 = arith.index_cast %0 : i32 to index
      %c0_21 = arith.constant 0 : index
      %c0_22 = arith.constant 0 : index
      %51 = vector.load %arg5[%50, %c0_21, %c0_22] : memref<3x20x128xf32, #tpu.memory_space<vmem>>, vector<1x20x128xf32>
      %52 = vector.shape_cast %51 : vector<1x20x128xf32> to vector<20x128xf32>
      %53 = vector.shape_cast %49 : vector<20x128xf32> to vector<1x20x128xf32>
      tpu.vector_store %arg5[%50, %c0_21, %c0_22], %53 {strides = array<i32>} : memref<3x20x128xf32, #tpu.memory_space<vmem>>, vector<1x20x128xf32>,
      %54 = arith.index_cast %0 : i32 to index
      %c0_23 = arith.constant 0 : index
      %c0_24 = arith.constant 0 : index
      %55 = vector.load %arg6[%54, %c0_23, %c0_24] : memref<3x20x128xf32, #tpu.memory_space<vmem>>, vector<1x20x128xf32>
      %56 = vector.shape_cast %55 : vector<1x20x128xf32> to vector<20x128xf32>
      %57 = vector.shape_cast %49 : vector<20x128xf32> to vector<1x20x128xf32>
      tpu.vector_store %arg6[%54, %c0_23, %c0_24], %57 {strides = array<i32>} : memref<3x20x128xf32, #tpu.memory_space<vmem>>, vector<1x20x128xf32>,
    } else {
    }
    %c1_i32_18 = arith.constant 1 : i32
    %46 = arith.cmpi sge, %arg1, %c1_i32_18 : i32
    %47 = arith.extui %46 : i1 to i32
    %c0_i32_19 = arith.constant 0 : i32
    %48 = arith.cmpi ne, %47, %c0_i32_19 : i32
    scf.if %48 {
      %49 = arith.index_cast %4 : i32 to index
      %c0_20 = arith.constant 0 : index
      %c0_21 = arith.constant 0 : index
      %50 = vector.load %arg5[%49, %c0_20, %c0_21] : memref<3x20x128xf32, #tpu.memory_space<vmem>>, vector<1x20x128xf32>
      %51 = vector.shape_cast %50 : vector<1x20x128xf32> to vector<20x128xf32>
      %52 = arith.index_cast %2 : i32 to index
      %c0_22 = arith.constant 0 : index
      %c0_23 = arith.constant 0 : index
      %53 = vector.load %arg5[%52, %c0_22, %c0_23] : memref<3x20x128xf32, #tpu.memory_space<vmem>>, vector<1x20x128xf32>
      %54 = vector.shape_cast %53 : vector<1x20x128xf32> to vector<20x128xf32>
      %55 = arith.index_cast %0 : i32 to index
      %c0_24 = arith.constant 0 : index
      %c0_25 = arith.constant 0 : index
      %56 = vector.load %arg5[%55, %c0_24, %c0_25] : memref<3x20x128xf32, #tpu.memory_space<vmem>>, vector<1x20x128xf32>
      %57 = vector.shape_cast %56 : vector<1x20x128xf32> to vector<20x128xf32>
      %58 = vector.extract_strided_slice %54 {offsets = [0, 0], sizes = [20, 18], strides = [1, 1]} : vector<20x128xf32> to vector<20x18xf32>
      %59 = vector.extract_strided_slice %54 {offsets = [0, 1], sizes = [20, 18], strides = [1, 1]} : vector<20x128xf32> to vector<20x18xf32>
      %60 = vector.extract_strided_slice %54 {offsets = [0, 2], sizes = [20, 18], strides = [1, 1]} : vector<20x128xf32> to vector<20x18xf32>
      %61 = arith.subf %58, %60 : vector<20x18xf32>
      %cst_26 = arith.constant 2.000000e+00 : f32
      %62 = vector.broadcast %cst_26 : f32 to vector<20x18xf32>
      %63 = arith.mulf %62, %59 : vector<20x18xf32>
      %64 = arith.addf %58, %63 : vector<20x18xf32>
      %65 = arith.addf %64, %60 : vector<20x18xf32>
      %66 = vector.extract_strided_slice %61 {offsets = [0, 0], sizes = [18, 18], strides = [1, 1]} : vector<20x18xf32> to vector<18x18xf32>
      %67 = vector.extract_strided_slice %61 {offsets = [1, 0], sizes = [18, 18], strides = [1, 1]} : vector<20x18xf32> to vector<18x18xf32>
      %cst_27 = arith.constant 2.000000e+00 : f32
      %68 = vector.broadcast %cst_27 : f32 to vector<18x18xf32>
      %69 = arith.mulf %68, %67 : vector<18x18xf32>
      %70 = arith.addf %66, %69 : vector<18x18xf32>
      %71 = vector.extract_strided_slice %61 {offsets = [2, 0], sizes = [18, 18], strides = [1, 1]} : vector<20x18xf32> to vector<18x18xf32>
      %72 = arith.addf %70, %71 : vector<18x18xf32>
      %73 = vector.extract_strided_slice %65 {offsets = [0, 0], sizes = [18, 18], strides = [1, 1]} : vector<20x18xf32> to vector<18x18xf32>
      %74 = vector.extract_strided_slice %65 {offsets = [2, 0], sizes = [18, 18], strides = [1, 1]} : vector<20x18xf32> to vector<18x18xf32>
      %75 = arith.subf %73, %74 : vector<18x18xf32>
      %76 = vector.extract_strided_slice %51 {offsets = [1, 1], sizes = [18, 18], strides = [1, 1]} : vector<20x128xf32> to vector<18x18xf32>
      %77 = vector.extract_strided_slice %57 {offsets = [1, 1], sizes = [18, 18], strides = [1, 1]} : vector<20x128xf32> to vector<18x18xf32>
      %78 = arith.subf %76, %77 : vector<18x18xf32>
      %79 = vector.extract_strided_slice %59 {offsets = [0, 0], sizes = [18, 18], strides = [1, 1]} : vector<20x18xf32> to vector<18x18xf32>
      %80 = arith.addf %78, %79 : vector<18x18xf32>
      %81 = vector.extract_strided_slice %58 {offsets = [1, 0], sizes = [18, 18], strides = [1, 1]} : vector<20x18xf32> to vector<18x18xf32>
      %82 = arith.addf %80, %81 : vector<18x18xf32>
      %83 = vector.extract_strided_slice %59 {offsets = [1, 0], sizes = [18, 18], strides = [1, 1]} : vector<20x18xf32> to vector<18x18xf32>
      %cst_28 = arith.constant 2.000000e+00 : f32
      %84 = vector.broadcast %cst_28 : f32 to vector<18x18xf32>
      %85 = arith.mulf %84, %83 : vector<18x18xf32>
      %86 = arith.addf %82, %85 : vector<18x18xf32>
      %87 = vector.extract_strided_slice %60 {offsets = [1, 0], sizes = [18, 18], strides = [1, 1]} : vector<20x18xf32> to vector<18x18xf32>
      %88 = arith.addf %86, %87 : vector<18x18xf32>
      %89 = vector.extract_strided_slice %59 {offsets = [2, 0], sizes = [18, 18], strides = [1, 1]} : vector<20x18xf32> to vector<18x18xf32>
      %90 = arith.addf %88, %89 : vector<18x18xf32>
      %91 = math.absf %72 : vector<18x18xf32>
      %92 = math.absf %75 : vector<18x18xf32>
      %93 = arith.addf %91, %92 : vector<18x18xf32>
      %94 = math.absf %90 : vector<18x18xf32>
      %95 = arith.addf %93, %94 : vector<18x18xf32>
      %cst_29 = arith.constant 0.333333343 : f32
      %96 = vector.broadcast %cst_29 : f32 to vector<18x18xf32>
      %97 = arith.mulf %95, %96 : vector<18x18xf32>
      %98 = arith.index_cast %4 : i32 to index
      %c0_30 = arith.constant 0 : index
      %c0_31 = arith.constant 0 : index
      %99 = vector.load %arg6[%98, %c0_30, %c0_31] : memref<3x20x128xf32, #tpu.memory_space<vmem>>, vector<1x20x128xf32>
      %100 = vector.shape_cast %99 : vector<1x20x128xf32> to vector<20x128xf32>
      %101 = arith.index_cast %2 : i32 to index
      %c0_32 = arith.constant 0 : index
      %c0_33 = arith.constant 0 : index
      %102 = vector.load %arg6[%101, %c0_32, %c0_33] : memref<3x20x128xf32, #tpu.memory_space<vmem>>, vector<1x20x128xf32>
      %103 = vector.shape_cast %102 : vector<1x20x128xf32> to vector<20x128xf32>
      %104 = arith.index_cast %0 : i32 to index
      %c0_34 = arith.constant 0 : index
      %c0_35 = arith.constant 0 : index
      %105 = vector.load %arg6[%104, %c0_34, %c0_35] : memref<3x20x128xf32, #tpu.memory_space<vmem>>, vector<1x20x128xf32>
      %106 = vector.shape_cast %105 : vector<1x20x128xf32> to vector<20x128xf32>
      %107 = vector.extract_strided_slice %103 {offsets = [0, 0], sizes = [20, 18], strides = [1, 1]} : vector<20x128xf32> to vector<20x18xf32>
      %108 = vector.extract_strided_slice %103 {offsets = [0, 1], sizes = [20, 18], strides = [1, 1]} : vector<20x128xf32> to vector<20x18xf32>
      %109 = vector.extract_strided_slice %103 {offsets = [0, 2], sizes = [20, 18], strides = [1, 1]} : vector<20x128xf32> to vector<20x18xf32>
      %110 = arith.subf %107, %109 : vector<20x18xf32>
      %cst_36 = arith.constant 2.000000e+00 : f32
      %111 = vector.broadcast %cst_36 : f32 to vector<20x18xf32>
      %112 = arith.mulf %111, %108 : vector<20x18xf32>
      %113 = arith.addf %107, %112 : vector<20x18xf32>
      %114 = arith.addf %113, %109 : vector<20x18xf32>
      %115 = vector.extract_strided_slice %110 {offsets = [0, 0], sizes = [18, 18], strides = [1, 1]} : vector<20x18xf32> to vector<18x18xf32>
      %116 = vector.extract_strided_slice %110 {offsets = [1, 0], sizes = [18, 18], strides = [1, 1]} : vector<20x18xf32> to vector<18x18xf32>
      %cst_37 = arith.constant 2.000000e+00 : f32
      %117 = vector.broadcast %cst_37 : f32 to vector<18x18xf32>
      %118 = arith.mulf %117, %116 : vector<18x18xf32>
      %119 = arith.addf %115, %118 : vector<18x18xf32>
      %120 = vector.extract_strided_slice %110 {offsets = [2, 0], sizes = [18, 18], strides = [1, 1]} : vector<20x18xf32> to vector<18x18xf32>
      %121 = arith.addf %119, %120 : vector<18x18xf32>
      %122 = vector.extract_strided_slice %114 {offsets = [0, 0], sizes = [18, 18], strides = [1, 1]} : vector<20x18xf32> to vector<18x18xf32>
      %123 = vector.extract_strided_slice %114 {offsets = [2, 0], sizes = [18, 18], strides = [1, 1]} : vector<20x18xf32> to vector<18x18xf32>
      %124 = arith.subf %122, %123 : vector<18x18xf32>
      %125 = vector.extract_strided_slice %100 {offsets = [1, 1], sizes = [18, 18], strides = [1, 1]} : vector<20x128xf32> to vector<18x18xf32>
      %126 = vector.extract_strided_slice %106 {offsets = [1, 1], sizes = [18, 18], strides = [1, 1]} : vector<20x128xf32> to vector<18x18xf32>
      %127 = arith.subf %125, %126 : vector<18x18xf32>
      %128 = vector.extract_strided_slice %108 {offsets = [0, 0], sizes = [18, 18], strides = [1, 1]} : vector<20x18xf32> to vector<18x18xf32>
      %129 = arith.addf %127, %128 : vector<18x18xf32>
      %130 = vector.extract_strided_slice %107 {offsets = [1, 0], sizes = [18, 18], strides = [1, 1]} : vector<20x18xf32> to vector<18x18xf32>
      %131 = arith.addf %129, %130 : vector<18x18xf32>
      %132 = vector.extract_strided_slice %108 {offsets = [1, 0], sizes = [18, 18], strides = [1, 1]} : vector<20x18xf32> to vector<18x18xf32>
      %cst_38 = arith.constant 2.000000e+00 : f32
      %133 = vector.broadcast %cst_38 : f32 to vector<18x18xf32>
      %134 = arith.mulf %133, %132 : vector<18x18xf32>
      %135 = arith.addf %131, %134 : vector<18x18xf32>
      %136 = vector.extract_strided_slice %109 {offsets = [1, 0], sizes = [18, 18], strides = [1, 1]} : vector<20x18xf32> to vector<18x18xf32>
      %137 = arith.addf %135, %136 : vector<18x18xf32>
      %138 = vector.extract_strided_slice %108 {offsets = [2, 0], sizes = [18, 18], strides = [1, 1]} : vector<20x18xf32> to vector<18x18xf32>
      %139 = arith.addf %137, %138 : vector<18x18xf32>
      %140 = math.absf %121 : vector<18x18xf32>
      %141 = math.absf %124 : vector<18x18xf32>
      %142 = arith.addf %140, %141 : vector<18x18xf32>
      %143 = math.absf %139 : vector<18x18xf32>
      %144 = arith.addf %142, %143 : vector<18x18xf32>
      %cst_39 = arith.constant 0.333333343 : f32
      %145 = vector.broadcast %cst_39 : f32 to vector<18x18xf32>
      %146 = arith.mulf %144, %145 : vector<18x18xf32>
      %147 = arith.subf %97, %146 : vector<18x18xf32>
      %148 = arith.mulf %147, %147 : vector<18x18xf32>
      %cst_40 = arith.constant dense<0.000000e+00> : vector<18xf32>
      %149 = vector.multi_reduction <add>, %148, %cst_40 [0] : vector<18x18xf32> to vector<18xf32>
      %150 = vector.shape_cast %149 : vector<18xf32> to vector<1x18xf32>
      %cst_41 = arith.constant 0.000000e+00 : f32
      %151 = vector.broadcast %cst_41 : f32 to vector<1x110xf32>
      %152 = tpu.concatenate %150, %151 in 1 : vector<1x18xf32>, vector<1x110xf32> -> vector<1x128xf32>
      %c0_42 = arith.constant 0 : index
      %c4 = arith.constant 4 : index
      %c0_43 = arith.constant 0 : index
      %153 = vector.load %arg4[%c0_42, %c4, %c0_43] : memref<1x8x128xf32, #tpu.memory_space<vmem>>, vector<1x1x128xf32>
      %154 = vector.shape_cast %153 : vector<1x1x128xf32> to vector<1x128xf32>
      %155 = arith.addf %154, %152 : vector<1x128xf32>
      %c0_44 = arith.constant 0 : index
      %c4_45 = arith.constant 4 : index
      %c0_46 = arith.constant 0 : index
      %156 = vector.load %arg4[%c0_44, %c4_45, %c0_46] : memref<1x8x128xf32, #tpu.memory_space<vmem>>, vector<1x1x128xf32>
      %157 = vector.shape_cast %156 : vector<1x1x128xf32> to vector<1x128xf32>
      %158 = vector.shape_cast %155 : vector<1x128xf32> to vector<1x1x128xf32>
      tpu.vector_store %arg4[%c0_44, %c4_45, %c0_46], %158 {strides = array<i32>} : memref<1x8x128xf32, #tpu.memory_space<vmem>>, vector<1x1x128xf32>,
    } else {
    }
    return
  }
  func.func @transform_0(%arg0: i32, %arg1: i32) -> (i32, i32, i32, i32, i32) {
    %c0_i32 = arith.constant 0 : i32
    %0 = arith.cmpi eq, %arg1, %c0_i32 : i32
    %c8_i32 = arith.constant 8 : i32
    %1 = arith.cmpi sle, %arg1, %c8_i32 : i32
    %c1_i32 = arith.constant 1 : i32
    %2 = arith.subi %arg1, %c1_i32 : i32
    %c9_i32 = arith.constant 9 : i32
    %3 = arith.cmpi eq, %arg1, %c9_i32 : i32
    %c6_i32 = arith.constant 6 : i32
    %c0_i32_0 = arith.constant 0 : i32
    %4 = arith.select %3, %c6_i32, %c0_i32_0 : i32
    %5 = arith.select %1, %2, %4 : i32
    %c1_i32_1 = arith.constant 1 : i32
    %6 = arith.select %0, %c1_i32_1, %5 : i32
    %c0_i32_2 = arith.constant 0 : i32
    %c0_i32_3 = arith.constant 0 : i32
    %c0_i32_4 = arith.constant 0 : i32
    %c0_i32_5 = arith.constant 0 : i32
    return %arg0, %c0_i32_2, %6, %c0_i32_3, %c0_i32_4 : i32, i32, i32, i32, i32
  }
  func.func @transform_1(%arg0: i32, %arg1: i32) -> (i32, i32, i32, i32) {
    %c0_i32 = arith.constant 0 : i32
    %0 = arith.cmpi eq, %arg1, %c0_i32 : i32
    %c8_i32 = arith.constant 8 : i32
    %1 = arith.cmpi sle, %arg1, %c8_i32 : i32
    %c1_i32 = arith.constant 1 : i32
    %2 = arith.subi %arg1, %c1_i32 : i32
    %c9_i32 = arith.constant 9 : i32
    %3 = arith.cmpi eq, %arg1, %c9_i32 : i32
    %c6_i32 = arith.constant 6 : i32
    %c0_i32_0 = arith.constant 0 : i32
    %4 = arith.select %3, %c6_i32, %c0_i32_0 : i32
    %5 = arith.select %1, %2, %4 : i32
    %c1_i32_1 = arith.constant 1 : i32
    %6 = arith.select %0, %c1_i32_1, %5 : i32
    %c0_i32_2 = arith.constant 0 : i32
    %c0_i32_3 = arith.constant 0 : i32
    %c0_i32_4 = arith.constant 0 : i32
    return %arg0, %6, %c0_i32_2, %c0_i32_3 : i32, i32, i32, i32
  }
  func.func @transform_2(%arg0: i32, %arg1: i32) -> (i32, i32, i32) {
    %c0_i32 = arith.constant 0 : i32
    %c0_i32_0 = arith.constant 0 : i32
    %c0_i32_1 = arith.constant 0 : i32
    return %arg0, %c0_i32, %c0_i32_0 : i32, i32, i32
  }
}

</mosaic_0001>

<llo_original>
// kernel: dc_and_bce_loss.1
$region0: #{dc_and_bce_loss.1}
  #allocation0 [shape = 'u32[]', space=smem, size = 0x4, offset = 0x4, fixed_abs, tag = 'smem constant byte address 0x4 - core index']
  #allocation1 [shape = 'u32[144,128]{1,0:T(1,128)}', space=vmem, size = 0x12000, scoped, tag = 'internal scratch']
  #allocation2 [shape = 'f32[3,20,128]{2,1,0:T(8,128)}', space=vmem, size = 0x9000, scoped, tag = 'scratch operand']
  #allocation3 [shape = 'f32[3,20,128]{2,1,0:T(8,128)}', space=vmem, size = 0x9000, scoped, tag = 'scratch operand']
  #allocation8 [shape = 's32[]', space=sflag, size = 0x4, offset = 0, fixed_abs, tag = 'sflag constant byte address 0x0 - dummy sync flag']
  %s0 = inlined_call_operand.hbm [shape: f32[2,2,8,16,16], index: 0, kind: input, shape index: {}]
  %s1 = inlined_call_operand.hbm [shape: f32[2,8,16,16], index: 1, kind: input, shape index: {}]
  %s2 = inlined_call_operand.vmem [shape: f32[2,8,128], index: 2, kind: output, shape index: {}]
  %s3 = sld [smem:[#allocation0]]
  $region69: #{dc_and_bce_loss.1} parent=0
    _
  %s5 = ssub.s32 1, %s3
  %s6 = scalar_select 0, %s5, %s3
  $region1: #{dc_and_bce_loss.1} parent=0
    #allocation4 [shape = 'u8[32768]{0}', space=vmem, size = 0x8000, scoped, tag = 'input window, operand 0']
    #allocation5 [shape = 's32[2]{0}', space=sflag, size = 0x8, scoped, tag = 'scoped memory for dc_and_bce_loss.1']
    #allocation6 [shape = 'u8[16384]{0}', space=vmem, size = 0x4000, scoped, tag = 'input window, operand 1']
    #allocation7 [shape = 's32[2]{0}', space=sflag, size = 0x8, scoped, tag = 'scoped memory for dc_and_bce_loss.1']
    %7 = vsyncpa [#allocation5], 0
    %s8 = scalar_lea.sflag [#allocation5], 1
    %9 = vsyncpa %s8, 0
    %10 = vsyncpa [#allocation7], 0
    %s11 = scalar_lea.sflag [#allocation7], 1
    %12 = vsyncpa %s11, 0
    loop: start=0, step=1, limit=24
    $region2: #{dc_and_bce_loss.1} parent=1 // loop_pre_header
      _
    $region3: #{dc_and_bce_loss.1} parent=1 // loop_header
      %s14 = sphi 0, %s18
      %p15 = scmp.ge.s32.totalorder %s14, 24
      %s21 = sphi 0, %s33
      %s22 = sphi 0, %s29
      %s23 = sphi 0, %s21
      %s24 = sphi 0, %s22
      %s25 = sphi 0, %s23
      %s26 = sphi 0, %s24
      %s52 = sphi 0, %s54
      %s55 = sphi 0, %s52
      %s56 = sphi 0, %s55
      %s72 = sphi 0, %s56
      %s94 = sphi 0, %s96
      %s97 = sphi 0, %s94
      %s98 = sphi 0, %s97
      %s114 = sphi 0, %s98
      %s120 = sphi 0, %s122
      %s123 = sphi 0, %s120
      %s124 = sphi 0, %s123
      %s140 = sphi 0, %s124
    $region4: #{dc_and_bce_loss.1} parent=1 // loop_header_branch
      %17 = sbr.rel (%p15) target = $region8
    $region5: #{dc_and_bce_loss.1} parent=1 // loop_body
      %s19 = ssub.s32 %s14, 1
      %s20 = ssub.s32 %s14, 2
      %s27 = sadd.s32 1, %s22
      %p28 = scmp.ge.s32.totalorder %s27, 11
      %s29 = scalar_select %p28, 0, %s27
      %s30 = sadd.s32 1, %s21
      %s31 = scalar_select %p28, %s30, %s21
      %p32 = scmp.ge.s32.totalorder %s31, 2
      %s33 = scalar_select %p32, 0, %s31
      %p34 = scmp.eq.s32.totalorder %s22, 0
      %p35 = scmp.le.s32.totalorder %s22, 8
      %s36 = ssub.s32 %s22, 1
      %p37 = scmp.eq.s32.totalorder %s22, 9
      %s38 = scalar_select %p37, 6, 0
      %s39 = scalar_select %p35, %s36, %s38
      %s40 = scalar_select %p34, 1, %s39
      %p41 = scmp.eq.s32.totalorder %s29, 0
      %p42 = scmp.le.s32.totalorder %s29, 8
      %s43 = ssub.s32 %s29, 1
      %p44 = scmp.eq.s32.totalorder %s29, 9
      %s45 = scalar_select %p44, 6, 0
      %s46 = scalar_select %p42, %s43, %s45
      %s47 = scalar_select %p41, 1, %s46
      %s48 = ssub.s32 %s21, %s33
      %s49 = ssub.s32 %s40, %s47
      %s50 = sor.u32 %s48, %s49
      %p51 = scmp.eq.s32.totalorder %s50, 0
      %s53 = sadd.s32 %s52, 1
      %s54 = scalar_select %p51, %s52, %s53
      %p57 = pneg %p51
      %p58 = scmp.eq.s32.totalorder %s14, 21
      %p59 = por %p57, %p58
      %p60 = scmp.ne.s32.totalorder %s52, %s55
      %p61 = scmp.eq.s32.totalorder %s14, 0
      %p62 = por %p60, %p61
      %p63 = scmp.ne.s32.totalorder %s52, %s55
      %p64 = scmp.eq.s32.totalorder %s19, 21
      %p65 = por %p63, %p64
      %p66 = scmp.ne.s32.totalorder %s55, %s56
      %p67 = scmp.eq.s32.totalorder %s19, 0
      %p68 = por %p66, %p67
      %p69 = scmp.ne.s32.totalorder %s55, %s56
      %p70 = scmp.eq.s32.totalorder %s20, 21
      %p71 = por %p69, %p70
      %p73 = scmp.ne.s32.totalorder %s56, %s72
      %p74 = scmp.eq.s32.totalorder %s20, 0
      %p75 = por %p73, %p74
      %p76 = scmp.eq.s32.totalorder %s22, 0
      %p77 = scmp.le.s32.totalorder %s22, 8
      %s78 = ssub.s32 %s22, 1
      %p79 = scmp.eq.s32.totalorder %s22, 9
      %s80 = scalar_select %p79, 6, 0
      %s81 = scalar_select %p77, %s78, %s80
      %s82 = scalar_select %p76, 1, %s81
      %p83 = scmp.eq.s32.totalorder %s29, 0
      %p84 = scmp.le.s32.totalorder %s29, 8
      %s85 = ssub.s32 %s29, 1
      %p86 = scmp.eq.s32.totalorder %s29, 9
      %s87 = scalar_select %p86, 6, 0
      %s88 = scalar_select %p84, %s85, %s87
      %s89 = scalar_select %p83, 1, %s88
      %s90 = ssub.s32 %s21, %s33
      %s91 = ssub.s32 %s82, %s89
      %s92 = sor.u32 %s90, %s91
      %p93 = scmp.eq.s32.totalorder %s92, 0
      %s95 = sadd.s32 %s94, 1
      %s96 = scalar_select %p93, %s94, %s95
      %p99 = pneg %p93
      %p100 = scmp.eq.s32.totalorder %s14, 21
      %p101 = por %p99, %p100
      %p102 = scmp.ne.s32.totalorder %s94, %s97
      %p103 = scmp.eq.s32.totalorder %s14, 0
      %p104 = por %p102, %p103
      %p105 = scmp.ne.s32.totalorder %s94, %s97
      %p106 = scmp.eq.s32.totalorder %s19, 21
      %p107 = por %p105, %p106
      %p108 = scmp.ne.s32.totalorder %s97, %s98
      %p109 = scmp.eq.s32.totalorder %s19, 0
      %p110 = por %p108, %p109
      %p111 = scmp.ne.s32.totalorder %s97, %s98
      %p112 = scmp.eq.s32.totalorder %s20, 21
      %p113 = por %p111, %p112
      %p115 = scmp.ne.s32.totalorder %s98, %s114
      %p116 = scmp.eq.s32.totalorder %s20, 0
      %p117 = por %p115, %p116
      %s118 = ssub.s32 %s21, %s33
      %p119 = scmp.eq.s32.totalorder %s118, 0
      %s121 = sadd.s32 %s120, 1
      %s122 = scalar_select %p119, %s120, %s121
      %p125 = pneg %p119
      %p126 = scmp.eq.s32.totalorder %s14, 21
      %p127 = por %p125, %p126
      %p128 = scmp.ne.s32.totalorder %s120, %s123
      %p129 = scmp.eq.s32.totalorder %s14, 0
      %p130 = por %p128, %p129
      %p131 = scmp.ne.s32.totalorder %s120, %s123
      %p132 = scmp.eq.s32.totalorder %s19, 21
      %p133 = por %p131, %p132
      %p134 = scmp.ne.s32.totalorder %s123, %s124
      %p135 = scmp.eq.s32.totalorder %s19, 0
      %p136 = por %p134, %p135
      %p137 = scmp.ne.s32.totalorder %s123, %s124
      %p138 = scmp.eq.s32.totalorder %s20, 21
      %p139 = por %p137, %p138
      %p141 = scmp.ne.s32.totalorder %s124, %s140
      %p142 = scmp.eq.s32.totalorder %s20, 0
      %p143 = por %p141, %p142
      %p144 = scmp.le.s32.totalorder 1, %s14
      %p145 = scmp.lt.s32.totalorder %s14, 23
      %p146 = pnand %p144, %p145
      %p147 = pneg %p146
      // Predicated region
      $region9: #{dc_and_bce_loss.1} parent=5 // pred_check
        _
      $region10: #{dc_and_bce_loss.1} parent=5 // pred_check_branch
        %149 = sbr.rel (%p146) target = $region12
      $region11: #{dc_and_bce_loss.1} parent=5 // pred_region
        %s150 = ssub.s32 %s14, 1
      $region12: #{dc_and_bce_loss.1} parent=5 // pred_fallthru
        _
      %p151 = scmp.lt.s32.totalorder %s14, 22
      // Predicated region
      $region13: #{dc_and_bce_loss.1} parent=5 // pred_check
        %p152 = pneg %p151
      $region14: #{dc_and_bce_loss.1} parent=5 // pred_check_branch
        %154 = sbr.rel (%p152) target = $region16
      $region15: #{dc_and_bce_loss.1} parent=5 // pred_region
        // Predicated region
        $region17: #{dc_and_bce_loss.1} parent=15 // pred_check
          %p155 = pneg %p62
        $region18: #{dc_and_bce_loss.1} parent=15 // pred_check_branch
          %157 = sbr.rel (%p155) target = $region20
        $region19: #{dc_and_bce_loss.1} parent=15 // pred_region
          #allocation9 [shape = 'u32[6]{0}', space=smem, size = 0x18, scoped, tag = 'DMA stride descriptor']
          %s158 = sand.u32 %s52, 1
          %s159 = scalar_lea.sflag [#allocation5], %s158
          %s160 = sand.u32 %s52, 1
          %s161 = smul.addr %s160, 32
          %s162 = scalar_lea.vmem [#allocation4], %s161
          %p163 = scmp.eq.s32.totalorder %s22, 0
          %p164 = scmp.le.s32.totalorder %s22, 8
          %s165 = ssub.s32 %s22, 1
          %p166 = scmp.eq.s32.totalorder %s22, 9
          %s167 = scalar_select %p166, 6, 0
          %s168 = scalar_select %p164, %s165, %s167
          %s169 = scalar_select %p163, 1, %s168
          %s171 = ssub.s32 512, 512
          %172 = vsyncadd %s159, %s171
          %s173 = smul.addr %s169, 2
          %s174 = smul.addr %s21, 32
          %s175 = sadd.s32 %s173, %s174
          %s176 = smul.addr %s175, 128
          %s177 = scalar_lea.hbm %s0, %s176
          %s179 = sshll.u32 1, 14
          %s180 = sxor.u32 4294967295, %s179
          %s182 = sld [smem:[#allocation0]]
          %s183 = sadd.s32 2, %s182
          %s185 = sshll.u32 7, 26
          %s186 = sxor.u32 4294967295, %s185
          %s187 = sand.u32 0, %s186
          %s188 = sshll.u32 %s183, 26
          %s189 = sor.u32 %s187, %s188
          %s190 = sshll.u32 %s162, 4
          %s191 = int_to_ptr.vmem [resolvable:$true] %s190
          %197 = sst [smem:[#allocation9]] 2048
          %s198 = scalar_lea.smem [#allocation9], 1
          %199 = sst [smem:[%s198]] 256
          %s200 = scalar_lea.smem [#allocation9], 2
          %201 = sst [smem:[%s200]] 2
          %s202 = scalar_lea.smem [#allocation9], 3
          %203 = sst [smem:[%s202]] 128
          %s204 = scalar_lea.smem [#allocation9], 4
          %205 = sst [smem:[%s204]] 128
          %s206 = scalar_lea.smem [#allocation9], 5
          %207 = sst [smem:[%s206]] 8
          %209 = dma.general %s177, 512, %s191, %s159, 131072, [#allocation9], %s189, 0
        $region20: #{dc_and_bce_loss.1} parent=15 // pred_fallthru
          _
        // Predicated region
        $region21: #{dc_and_bce_loss.1} parent=15 // pred_check
          %p210 = pneg %p104
        $region22: #{dc_and_bce_loss.1} parent=15 // pred_check_branch
          %212 = sbr.rel (%p210) target = $region24
        $region23: #{dc_and_bce_loss.1} parent=15 // pred_region
          %s213 = sand.u32 %s94, 1
          %s214 = scalar_lea.sflag [#allocation7], %s213
          %s215 = sand.u32 %s94, 1
          %s216 = smul.addr %s215, 16
          %s217 = scalar_lea.vmem [#allocation6], %s216
          %p218 = scmp.eq.s32.totalorder %s22, 0
          %p219 = scmp.le.s32.totalorder %s22, 8
          %s220 = ssub.s32 %s22, 1
          %p221 = scmp.eq.s32.totalorder %s22, 9
          %s222 = scalar_select %p221, 6, 0
          %s223 = scalar_select %p219, %s220, %s222
          %s224 = scalar_select %p218, 1, %s223
          %s226 = ssub.s32 256, 256
          %227 = vsyncadd %s214, %s226
          %s228 = smul.addr %s224, 2
          %s229 = smul.addr %s21, 16
          %s230 = sadd.s32 %s228, %s229
          %s231 = smul.addr %s230, 128
          %s232 = scalar_lea.hbm %s1, %s231
          %s233 = sshll.u32 %s217, 4
          %s234 = int_to_ptr.vmem [resolvable:$true] %s233
          %239 = dma.hbm_to_vmem [thread:$0]  %s232, 256, %s234, %s214, 128, 128, 8
        $region24: #{dc_and_bce_loss.1} parent=15 // pred_fallthru
          _
      $region16: #{dc_and_bce_loss.1} parent=5 // pred_fallthru
        _
      %p240 = scmp.le.s32.totalorder 1, %s14
      %p241 = scmp.lt.s32.totalorder %s14, 23
      %p242 = pnand %p240, %p241
      %p243 = pneg %p242
      // Predicated region
      $region25: #{dc_and_bce_loss.1} parent=5 // pred_check
        _
      $region26: #{dc_and_bce_loss.1} parent=5 // pred_check_branch
        %245 = sbr.rel (%p242) target = $region28
      $region27: #{dc_and_bce_loss.1} parent=5 // pred_region
        %s246 = ssub.s32 %s14, 1
        %s247 = sand.u32 %s55, 1
        %s248 = scalar_lea.sflag [#allocation5], %s247
        %s249 = sand.u32 %s55, 1
        %s250 = smul.addr %s249, 32
        %s251 = scalar_lea.vmem [#allocation4], %s250
        // Predicated region
        $region29: #{dc_and_bce_loss.1} parent=27 // pred_check
          %p252 = pneg %p68
        $region30: #{dc_and_bce_loss.1} parent=27 // pred_check_branch
          %254 = sbr.rel (%p252) target = $region32
        $region31: #{dc_and_bce_loss.1} parent=27 // pred_region
          %255 = dma.done %s248, 512
        $region32: #{dc_and_bce_loss.1} parent=27 // pred_fallthru
          _
        %s256 = sand.u32 %s97, 1
        %s257 = scalar_lea.sflag [#allocation7], %s256
        %s258 = sand.u32 %s97, 1
        %s259 = smul.addr %s258, 16
        %s260 = scalar_lea.vmem [#allocation6], %s259
        // Predicated region
        $region33: #{dc_and_bce_loss.1} parent=27 // pred_check
          %p261 = pneg %p110
        $region34: #{dc_and_bce_loss.1} parent=27 // pred_check_branch
          %263 = sbr.rel (%p261) target = $region36
        $region35: #{dc_and_bce_loss.1} parent=27 // pred_region
          %264 = dma.done %s257, 256
        $region36: #{dc_and_bce_loss.1} parent=27 // pred_fallthru
          _
        %s265 = sand.u32 %s55, 1
        %s266 = scalar_lea.sflag [#allocation5], %s265
        %s267 = sand.u32 %s55, 1
        %s268 = smul.addr %s267, 32
        %s269 = scalar_lea.vmem [#allocation4], %s268
        %p270 = pneg %p68
        %p271 = pneg %p65
        %s272 = sand.u32 %s97, 1
        %s273 = scalar_lea.sflag [#allocation7], %s272
        %s274 = sand.u32 %s97, 1
        %s275 = smul.addr %s274, 16
        %s276 = scalar_lea.vmem [#allocation6], %s275
        %p277 = pneg %p110
        %p278 = pneg %p107
        %p279 = pneg %p136
        %p280 = pneg %p133
        %p281 = scmp.lt.s32.totalorder %s23, 1
        %s282 = scalar_select %p281, %s23, 1
        %s283 = smul.addr %s282, 8
        %s284 = scalar_lea.vmem %s2, %s283
        %p285 = scmp.eq.s32.totalorder %s24, 0
        %p286 = scmp.le.s32.totalorder %s24, 8
        %s287 = ssub.s32 %s24, 1
        %p288 = scmp.eq.s32.totalorder %s24, 9
        %s289 = scalar_select %p288, 6, 0
        %s290 = scalar_select %p286, %s287, %s289
        %s291 = scalar_select %p285, 1, %s290
        %p292 = scmp.eq.s32.totalorder %s24, 0
        %p293 = scmp.le.s32.totalorder %s24, 8
        %s294 = ssub.s32 %s24, 1
        %p295 = scmp.eq.s32.totalorder %s24, 9
        %s296 = scalar_select %p295, 6, 0
        %s297 = scalar_select %p293, %s294, %s296
        %s298 = scalar_select %p292, 1, %s297
        %p299 = scmp.lt.s32.totalorder %s23, 1
        %s300 = scalar_select %p299, %s23, 1
        %s301 = smul.addr %s300, 8
        %s302 = scalar_lea.vmem %s2, %s301
        %p303 = scmp.lt.s32.totalorder %s24, 0
        %s304 = ssub.s32 0, %s24
        %s305 = scalar_select %p303, %s304, %s24
        %s306 = sdiv.u32.pop %s305, 3
        %s307 = srem.u32.pop %s305, 3
        %s308 = ssub.s32 0, %s307
        %s309 = scalar_select %p303, %s308, %s307
        %s310 = sadd.s32 %s24, 2
        %p311 = scmp.lt.s32.totalorder %s310, 0
        %s312 = ssub.s32 0, %s310
        %s313 = scalar_select %p311, %s312, %s310
        %s314 = sdiv.u32.pop %s313, 3
        %s315 = srem.u32.pop %s313, 3
        %s316 = ssub.s32 0, %s315
        %s317 = scalar_select %p311, %s316, %s315
        %s318 = sadd.s32 %s24, 1
        %p319 = scmp.lt.s32.totalorder %s318, 0
        %s320 = ssub.s32 0, %s318
        %s321 = scalar_select %p319, %s320, %s318
        %s322 = sdiv.u32.pop %s321, 3
        %s323 = srem.u32.pop %s321, 3
        %s324 = ssub.s32 0, %s323
        %s325 = scalar_select %p319, %s324, %s323
        %p326 = scmp.eq.s32.totalorder %s24, 0
        // Predicated region
        $region37: #{dc_and_bce_loss.1} parent=27 // pred_check
          %p327 = pneg %p326
        $region38: #{dc_and_bce_loss.1} parent=27 // pred_check_branch
          %329 = sbr.rel (%p327) target = $region40
        $region39: #{dc_and_bce_loss.1} parent=27 // pred_region
          %330 = vst [vmem:[%s302] sm:$0xff] 0.0
          %331 = vst [vmem:[#allocation2] sm:$0xff] 0.0
          %332 = vst [vmem:[#allocation2 + $0x8] sm:$0xff] 0.0
          %333 = vst [vmem:[#allocation2 + $0x10] sm:$0xf] 0.0
          %334 = vst [vmem:[#allocation2 + $0x18] sm:$0xff] 0.0
          %335 = vst [vmem:[#allocation2 + $0x20] sm:$0xff] 0.0
          %336 = vst [vmem:[#allocation2 + $0x28] sm:$0xf] 0.0
          %337 = vst [vmem:[#allocation2 + $0x30] sm:$0xff] 0.0
          %338 = vst [vmem:[#allocation2 + $0x38] sm:$0xff] 0.0
          %339 = vst [vmem:[#allocation2 + $0x40] sm:$0xf] 0.0
          %340 = vst [vmem:[#allocation3] sm:$0xff] 0.0
          %341 = vst [vmem:[#allocation3 + $0x8] sm:$0xff] 0.0
          %342 = vst [vmem:[#allocation3 + $0x10] sm:$0xf] 0.0
          %343 = vst [vmem:[#allocation3 + $0x18] sm:$0xff] 0.0
          %344 = vst [vmem:[#allocation3 + $0x20] sm:$0xff] 0.0
          %345 = vst [vmem:[#allocation3 + $0x28] sm:$0xf] 0.0
          %346 = vst [vmem:[#allocation3 + $0x30] sm:$0xff] 0.0
          %347 = vst [vmem:[#allocation3 + $0x38] sm:$0xff] 0.0
          %348 = vst [vmem:[#allocation3 + $0x40] sm:$0xf] 0.0
        $region40: #{dc_and_bce_loss.1} parent=27 // pred_fallthru
          _
        %v349 = vld [vmem:[%s251] sm:$0xff]
        %v350 = vld [vmem:[%s251 + $0x8] sm:$0xff]
        %v351 = vld [vmem:[%s251 + $0x10] sm:$0xff]
        %v352 = vld [vmem:[%s251 + $0x18] sm:$0xff]
        %v353 = vld [vmem:[%s260] sm:$0xff]
        %v354 = vld [vmem:[%s260 + $0x8] sm:$0xff]
        %vm355 = vcmp.gt.f32.partialorder %v353, 0.0
        %vm356 = vcmp.gt.f32.partialorder %v354, 0.0
        %v357 = vsel %vm355, 1, 0
        %v358 = vsel %vm356, 1, 0
        %v359 = vcvt.s32.f32 %v357
        %v360 = vcvt.s32.f32 %v358
        %v361 = vsub.f32 %v351, %v349
        %v362 = vsub.f32 %v352, %v350
        %v363 = vand.u32 2147483647, %v361
        %v364 = vand.u32 2147483647, %v362
        %v365 = vsub.f32 0.0, %v363
        %v366 = vsub.f32 0.0, %v364
        %v367 = vmul.f32 %v365, 1.442695
        %v368 = vpow.pop %v367
        %v369 = vmul.f32 %v366, 1.442695
        %v370 = vpow.pop %v369
        %v371 = vadd.f32 %v368, 1.0
        %v372 = vadd.f32 %v370, 1.0
        %v373 = vlog2.pop %v371
        %v374 = vmul.f32 %v373, 0.6931472
        %v375 = vlog2.pop %v372
        %v376 = vmul.f32 %v375, 0.6931472
        %v377 = vmax.f32 %v361, 0.0
        %v378 = vmax.f32 %v362, 0.0
        %v379 = vadd.f32 %v374, %v377
        %v380 = vadd.f32 %v376, %v378
        %v381 = vmul.f32 %v359, %v361
        %v382 = vmul.f32 %v360, %v362
        %v383 = vsub.f32 %v379, %v381
        %v384 = vsub.f32 %v380, %v382
        %v385 = vsub.f32 %v361, %v379
        %v386 = vsub.f32 %v362, %v380
        %v387 = vmul.f32 %v385, 1.442695
        %v388 = vpow.pop %v387
        %v389 = vmul.f32 %v386, 1.442695
        %v390 = vpow.pop %v389
        %p391 = scmp.ge.s32.totalorder %s24, 1
        %p392 = scmp.le.s32.totalorder %s24, 8
        %p393 = pnand %p391, %p392
        %p394 = pneg %p393
        // Predicated region
        $region41: #{dc_and_bce_loss.1} parent=27 // pred_check
          _
        $region42: #{dc_and_bce_loss.1} parent=27 // pred_check_branch
          %396 = sbr.rel (%p393) target = $region44
        $region43: #{dc_and_bce_loss.1} parent=27 // pred_region
          %v397 = vmul.f32 %v388, %v359
          %v398 = vmul.f32 %v390, %v360
          %vm399 = vcmask 130048
          %v400 = vsel %vm399, %v397, 0.0
          %v401 = vsel %vm399, %v398, 0.0
          %v402 = vadd.f32 %v400, %v401
          %v403 = vrot.slane %v402, 4
          %v404 = vadd.f32 %v402, %v403
          %v405 = vrot.slane %v404, 2
          %v406 = vadd.f32 %v404, %v405
          %v407 = vrot.slane %v406, 1
          %v408 = vadd.f32 %v406, %v407
          %v409 = vsel %vm399, %v408, 0.0
          %v410 = vld [vmem:[%s302] sm:$0x1]
          %v411 = vadd.f32 %v410, %v409
          %412 = vst [vmem:[%s302] sm:$0x1] %v411
          %v413 = vsel %vm399, %v388, 0.0
          %v414 = vsel %vm399, %v390, 0.0
          %v415 = vadd.f32 %v413, %v414
          %v416 = vrot.slane %v415, 4
          %v417 = vadd.f32 %v415, %v416
          %v418 = vrot.slane %v417, 2
          %v419 = vadd.f32 %v417, %v418
          %v420 = vrot.slane %v419, 1
          %v421 = vadd.f32 %v419, %v420
          %v422 = vsel %vm399, %v421, 0.0
          %v423 = vld [vmem:[%s302 + $0x1] sm:$0x1]
          %v424 = vadd.f32 %v423, %v422
          %425 = vst [vmem:[%s302 + $0x1] sm:$0x1] %v424
          %v426 = vsel %vm399, %v359, 0.0
          %v427 = vsel %vm399, %v360, 0.0
          %v428 = vadd.f32 %v426, %v427
          %v429 = vrot.slane %v428, 4
          %v430 = vadd.f32 %v428, %v429
          %v431 = vrot.slane %v430, 2
          %v432 = vadd.f32 %v430, %v431
          %v433 = vrot.slane %v432, 1
          %v434 = vadd.f32 %v432, %v433
          %v435 = vsel %vm399, %v434, 0.0
          %v436 = vld [vmem:[%s302 + $0x2] sm:$0x1]
          %v437 = vadd.f32 %v436, %v435
          %438 = vst [vmem:[%s302 + $0x2] sm:$0x1] %v437
          %v439 = vsel %vm399, %v383, 0.0
          %v440 = vsel %vm399, %v384, 0.0
          %v441 = vadd.f32 %v439, %v440
          %v442 = vrot.slane %v441, 4
          %v443 = vadd.f32 %v441, %v442
          %v444 = vrot.slane %v443, 2
          %v445 = vadd.f32 %v443, %v444
          %v446 = vrot.slane %v445, 1
          %v447 = vadd.f32 %v445, %v446
          %v448 = vsel %vm399, %v447, 0.0
          %v449 = vld [vmem:[%s302 + $0x3] sm:$0x1]
          %v450 = vadd.f32 %v449, %v448
          %451 = vst [vmem:[%s302 + $0x3] sm:$0x1] %v450
        $region44: #{dc_and_bce_loss.1} parent=27 // pred_fallthru
          _
        %p452 = scmp.le.s32.totalorder %s24, 9
        // Predicated region
        $region45: #{dc_and_bce_loss.1} parent=27 // pred_check
          %p453 = pneg %p452
        $region46: #{dc_and_bce_loss.1} parent=27 // pred_check_branch
          %455 = sbr.rel (%p453) target = $region48
        $region47: #{dc_and_bce_loss.1} parent=27 // pred_region
          %v457 = vrot.slane %v388, 1
          %vm460 = vcmask 1040384
          %v461 = vrot.slane %v388, 7
          %v462 = vrot.slane %v390, 7
          %v463 = vsel %vm460, %v461, %v462
          %v467 = vrot.slane %v390, 5
          %v469 = vsel %vm460, %v457, %v461
          %v470 = vsel %vm460, %v462, %v467
          %473 = vrot.lane.b32.xlu0 %v469, 2
          %v474 = vpop.permute.xlu0 %473
          %475 = vrot.lane.b32.xlu0 %v463, 2
          %v476 = vpop.permute.xlu0 %475
          %477 = vrot.lane.b32.xlu0 %v470, 2
          %v478 = vpop.permute.xlu0 %477
          %482 = vrot.lane.b32.xlu0 %v469, 4
          %v483 = vpop.permute.xlu0 %482
          %484 = vrot.lane.b32.xlu0 %v463, 4
          %v485 = vpop.permute.xlu0 %484
          %486 = vrot.lane.b32.xlu0 %v470, 4
          %v487 = vpop.permute.xlu0 %486
          %vm491 = vcmask 7168
          %v492 = vsel %vm491, 0.0, %v469
          %v493 = vsel %vm491, 0.0, %v463
          %v494 = vsel %vm491, 0.0, %v470
          %vm495 = vcmask 15360
          %v496 = vsel %vm495, %v492, %v474
          %v497 = vsel %vm495, %v493, %v476
          %v498 = vsel %vm495, %v494, %v478
          %vm499 = vcmask 146432
          %v500 = vsel %vm499, %v496, %v483
          %v501 = vsel %vm499, %v497, %v485
          %v502 = vsel %vm499, %v498, %v487
          %vm503 = vcmask 154624
          %v504 = vsel %vm503, %v500, 0.0
          %v505 = vsel %vm503, %v501, 0.0
          %v506 = vsel %vm503, %v502, 0.0
          %v510 = vrot.slane %v504, 7
          %v511 = vrot.slane %v505, 7
          %v512 = vsel %vm460, %v510, %v511
          %v513 = vrot.slane %v506, 7
          %v514 = vsel %vm460, %v511, %v513
          %v518 = vsel %vm460, 0.0, %v510
          %vm519 = vcmask 1042432
          %v520 = vsel %vm519, %v514, 0.0
          %s521 = smul.u32 %s309, 24
          %s522 = scalar_lea.vmem [#allocation2], %s521
          %523 = vst [vmem:[%s522] sm:$0xff] %v518
          %524 = vst [vmem:[%s522 + $0x8] sm:$0xff] %v512
          %525 = vst [vmem:[%s522 + $0x10] sm:$0xf] %v520
          %v527 = vrot.slane %v359, 1
          %v530 = vrot.slane %v359, 7
          %v531 = vrot.slane %v360, 7
          %v532 = vsel %vm460, %v530, %v531
          %v536 = vrot.slane %v360, 5
          %v538 = vsel %vm460, %v527, %v530
          %v539 = vsel %vm460, %v531, %v536
          %542 = vrot.lane.b32.xlu0 %v538, 2
          %v543 = vpop.permute.xlu0 %542
          %544 = vrot.lane.b32.xlu0 %v532, 2
          %v545 = vpop.permute.xlu0 %544
          %546 = vrot.lane.b32.xlu0 %v539, 2
          %v547 = vpop.permute.xlu0 %546
          %551 = vrot.lane.b32.xlu0 %v538, 4
          %v552 = vpop.permute.xlu0 %551
          %553 = vrot.lane.b32.xlu0 %v532, 4
          %v554 = vpop.permute.xlu0 %553
          %555 = vrot.lane.b32.xlu0 %v539, 4
          %v556 = vpop.permute.xlu0 %555
          %v560 = vsel %vm491, 0.0, %v538
          %v561 = vsel %vm491, 0.0, %v532
          %v562 = vsel %vm491, 0.0, %v539
          %v563 = vsel %vm495, %v560, %v543
          %v564 = vsel %vm495, %v561, %v545
          %v565 = vsel %vm495, %v562, %v547
          %v566 = vsel %vm499, %v563, %v552
          %v567 = vsel %vm499, %v564, %v554
          %v568 = vsel %vm499, %v565, %v556
          %v569 = vsel %vm503, %v566, 0.0
          %v570 = vsel %vm503, %v567, 0.0
          %v571 = vsel %vm503, %v568, 0.0
          %v575 = vrot.slane %v569, 7
          %v576 = vrot.slane %v570, 7
          %v577 = vsel %vm460, %v575, %v576
          %v578 = vrot.slane %v571, 7
          %v579 = vsel %vm460, %v576, %v578
          %v583 = vsel %vm460, 0.0, %v575
          %v584 = vsel %vm519, %v579, 0.0
          %s585 = scalar_lea.vmem [#allocation3], %s521
          %586 = vst [vmem:[%s585] sm:$0xff] %v583
          %587 = vst [vmem:[%s585 + $0x8] sm:$0xff] %v577
          %588 = vst [vmem:[%s585 + $0x10] sm:$0xf] %v584
        $region48: #{dc_and_bce_loss.1} parent=27 // pred_fallthru
          _
        %p589 = scmp.eq.s32.totalorder %s24, 10
        // Predicated region
        $region49: #{dc_and_bce_loss.1} parent=27 // pred_check
          %p590 = pneg %p589
        $region50: #{dc_and_bce_loss.1} parent=27 // pred_check_branch
          %592 = sbr.rel (%p590) target = $region52
        $region51: #{dc_and_bce_loss.1} parent=27 // pred_region
          %s593 = smul.u32 %s309, 24
          %s594 = scalar_lea.vmem [#allocation2], %s593
          %595 = vst [vmem:[%s594] sm:$0xff] 0.0
          %596 = vst [vmem:[%s594 + $0x8] sm:$0xff] 0.0
          %597 = vst [vmem:[%s594 + $0x10] sm:$0xf] 0.0
          %s598 = scalar_lea.vmem [#allocation3], %s593
          %599 = vst [vmem:[%s598] sm:$0xff] 0.0
          %600 = vst [vmem:[%s598 + $0x8] sm:$0xff] 0.0
          %601 = vst [vmem:[%s598 + $0x10] sm:$0xf] 0.0
        $region52: #{dc_and_bce_loss.1} parent=27 // pred_fallthru
          _
        // Predicated region
        $region53: #{dc_and_bce_loss.1} parent=27 // pred_check
          %p602 = pneg %p391
        $region54: #{dc_and_bce_loss.1} parent=27 // pred_check_branch
          %604 = sbr.rel (%p602) target = $region56
        $region55: #{dc_and_bce_loss.1} parent=27 // pred_region
          %s605 = smul.u32 %s325, 24
          %s606 = scalar_lea.vmem [#allocation2], %s605
          %v607 = vld [vmem:[%s606] sm:$0xff]
          %v608 = vld [vmem:[%s606 + $0x8] sm:$0xff]
          %v609 = vld [vmem:[%s606 + $0x10] sm:$0xf]
          %s610 = smul.u32 %s317, 24
          %s611 = scalar_lea.vmem [#allocation2], %s610
          %v612 = vld [vmem:[%s611] sm:$0xff]
          %v613 = vld [vmem:[%s611 + $0x8] sm:$0xff]
          %v614 = vld [vmem:[%s611 + $0x10] sm:$0xf]
          %s615 = smul.u32 %s309, 24
          %s616 = scalar_lea.vmem [#allocation2], %s615
          %v617 = vld [vmem:[%s616] sm:$0xff]
          %v618 = vld [vmem:[%s616 + $0x8] sm:$0xff]
          %v619 = vld [vmem:[%s616 + $0x10] sm:$0xf]
          %623 = vrot.lane.b32.xlu0 %v612, 126
          %v624 = vpop.permute.xlu0 %623
          %625 = vrot.lane.b32.xlu0 %v613, 126
          %v626 = vpop.permute.xlu0 %625
          %627 = vrot.lane.b32.xlu0 %v614, 126
          %v628 = vpop.permute.xlu0 %627
          %v632 = vsub.f32 %v612, %v624
          %v633 = vsub.f32 %v613, %v626
          %v634 = vsub.f32 %v614, %v628
          %v635 = vmul.f32 %v612, 2.0
          %v636 = vmul.f32 %v613, 2.0
          %v637 = vmul.f32 %v614, 2.0
          %641 = vrot.lane.b32.xlu0 %v635, 127
          %v642 = vpop.permute.xlu0 %641
          %643 = vrot.lane.b32.xlu0 %v636, 127
          %v644 = vpop.permute.xlu0 %643
          %645 = vrot.lane.b32.xlu0 %v637, 127
          %v646 = vpop.permute.xlu0 %645
          %v650 = vadd.f32 %v612, %v642
          %v651 = vadd.f32 %v613, %v644
          %v652 = vadd.f32 %v614, %v646
          %v653 = vadd.f32 %v650, %v624
          %v654 = vadd.f32 %v651, %v626
          %v655 = vadd.f32 %v652, %v628
          %v656 = vmul.f32 %v632, 2.0
          %v657 = vmul.f32 %v633, 2.0
          %v658 = vmul.f32 %v634, 2.0
          %vm662 = vcmask 1046528
          %v663 = vrot.slane %v656, 1
          %v664 = vrot.slane %v657, 1
          %v665 = vsel %vm662, %v663, %v664
          %v666 = vrot.slane %v658, 1
          %v667 = vsel %vm662, %v664, %v666
          %v671 = vadd.f32 %v632, %v665
          %v672 = vadd.f32 %v633, %v667
          %v673 = vadd.f32 %v634, %v666
          %vm677 = vcmask 1045504
          %v678 = vrot.slane %v632, 2
          %v679 = vrot.slane %v633, 2
          %v680 = vsel %vm677, %v678, %v679
          %v681 = vrot.slane %v634, 2
          %v682 = vsel %vm677, %v679, %v681
          %v686 = vadd.f32 %v671, %v680
          %v687 = vadd.f32 %v672, %v682
          %v688 = vadd.f32 %v673, %v681
          %v692 = vrot.slane %v653, 2
          %v693 = vrot.slane %v654, 2
          %v694 = vsel %vm677, %v692, %v693
          %v695 = vrot.slane %v655, 2
          %v696 = vsel %vm677, %v693, %v695
          %v700 = vsub.f32 %v653, %v694
          %v701 = vsub.f32 %v654, %v696
          %v702 = vsub.f32 %v655, %v695
          %v703 = vsub.f32 %v607, %v617
          %v704 = vsub.f32 %v608, %v618
          %v705 = vsub.f32 %v609, %v619
          %vm706 = vcmask 1040384
          %v707 = vrot.slane %v612, 7
          %v708 = vrot.slane %v613, 7
          %v709 = vsel %vm706, %v707, %v708
          %v710 = vrot.slane %v614, 7
          %v711 = vsel %vm706, %v708, %v710
          %v715 = vadd.f32 %v703, %v707
          %v716 = vadd.f32 %v704, %v709
          %v717 = vadd.f32 %v705, %v711
          %718 = vrot.lane.b32.xlu0 %v612, 1
          %v719 = vpop.permute.xlu0 %718
          %720 = vrot.lane.b32.xlu0 %v613, 1
          %v721 = vpop.permute.xlu0 %720
          %722 = vrot.lane.b32.xlu0 %v614, 1
          %v723 = vpop.permute.xlu0 %722
          %v727 = vadd.f32 %v715, %v719
          %v728 = vadd.f32 %v716, %v721
          %v729 = vadd.f32 %v717, %v723
          %v730 = vadd.f32 %v727, %v635
          %v731 = vadd.f32 %v728, %v636
          %v732 = vadd.f32 %v729, %v637
          %733 = vrot.lane.b32.xlu0 %v612, 127
          %v734 = vpop.permute.xlu0 %733
          %735 = vrot.lane.b32.xlu0 %v613, 127
          %v736 = vpop.permute.xlu0 %735
          %737 = vrot.lane.b32.xlu0 %v614, 127
          %v738 = vpop.permute.xlu0 %737
          %v742 = vadd.f32 %v730, %v734
          %v743 = vadd.f32 %v731, %v736
          %v744 = vadd.f32 %v732, %v738
          %v745 = vrot.slane %v612, 1
          %v746 = vrot.slane %v613, 1
          %v747 = vsel %vm662, %v745, %v746
          %v748 = vrot.slane %v614, 1
          %v749 = vsel %vm662, %v746, %v748
          %v753 = vadd.f32 %v742, %v747
          %v754 = vadd.f32 %v743, %v749
          %v755 = vadd.f32 %v744, %v748
          %v756 = vand.u32 2147483647, %v686
          %v757 = vand.u32 2147483647, %v687
          %v758 = vand.u32 2147483647, %v688
          %v759 = vand.u32 2147483647, %v700
          %v760 = vand.u32 2147483647, %v701
          %v761 = vand.u32 2147483647, %v702
          %v762 = vadd.f32 %v756, %v759
          %v763 = vadd.f32 %v757, %v760
          %v764 = vadd.f32 %v758, %v761
          %v765 = vand.u32 2147483647, %v753
          %v766 = vand.u32 2147483647, %v754
          %v767 = vand.u32 2147483647, %v755
          %v771 = vrot.slane %v765, 1
          %v772 = vrot.slane %v766, 1
          %v773 = vsel %vm662, %v771, %v772
          %v774 = vrot.slane %v767, 1
          %v775 = vsel %vm662, %v772, %v774
          %776 = vrot.lane.b32.xlu0 %v773, 127
          %v777 = vpop.permute.xlu0 %776
          %778 = vrot.lane.b32.xlu0 %v775, 127
          %v779 = vpop.permute.xlu0 %778
          %780 = vrot.lane.b32.xlu0 %v774, 127
          %v781 = vpop.permute.xlu0 %780
          %v785 = vadd.f32 %v762, %v777
          %v786 = vadd.f32 %v763, %v779
          %v787 = vadd.f32 %v764, %v781
          %v788 = vmul.f32 %v785, 0.33333334
          %v789 = vmul.f32 %v786, 0.33333334
          %v790 = vmul.f32 %v787, 0.33333334
          %s791 = scalar_lea.vmem [#allocation3], %s605
          %v792 = vld [vmem:[%s791] sm:$0xff]
          %v793 = vld [vmem:[%s791 + $0x8] sm:$0xff]
          %v794 = vld [vmem:[%s791 + $0x10] sm:$0xf]
          %s795 = scalar_lea.vmem [#allocation3], %s610
          %v796 = vld [vmem:[%s795] sm:$0xff]
          %v797 = vld [vmem:[%s795 + $0x8] sm:$0xff]
          %v798 = vld [vmem:[%s795 + $0x10] sm:$0xf]
          %s799 = scalar_lea.vmem [#allocation3], %s615
          %v800 = vld [vmem:[%s799] sm:$0xff]
          %v801 = vld [vmem:[%s799 + $0x8] sm:$0xff]
          %v802 = vld [vmem:[%s799 + $0x10] sm:$0xf]
          %806 = vrot.lane.b32.xlu0 %v796, 126
          %v807 = vpop.permute.xlu0 %806
          %808 = vrot.lane.b32.xlu0 %v797, 126
          %v809 = vpop.permute.xlu0 %808
          %810 = vrot.lane.b32.xlu0 %v798, 126
          %v811 = vpop.permute.xlu0 %810
          %v815 = vsub.f32 %v796, %v807
          %v816 = vsub.f32 %v797, %v809
          %v817 = vsub.f32 %v798, %v811
          %v818 = vmul.f32 %v796, 2.0
          %v819 = vmul.f32 %v797, 2.0
          %v820 = vmul.f32 %v798, 2.0
          %824 = vrot.lane.b32.xlu0 %v818, 127
          %v825 = vpop.permute.xlu0 %824
          %826 = vrot.lane.b32.xlu0 %v819, 127
          %v827 = vpop.permute.xlu0 %826
          %828 = vrot.lane.b32.xlu0 %v820, 127
          %v829 = vpop.permute.xlu0 %828
          %v833 = vadd.f32 %v796, %v825
          %v834 = vadd.f32 %v797, %v827
          %v835 = vadd.f32 %v798, %v829
          %v836 = vadd.f32 %v833, %v807
          %v837 = vadd.f32 %v834, %v809
          %v838 = vadd.f32 %v835, %v811
          %v839 = vmul.f32 %v815, 2.0
          %v840 = vmul.f32 %v816, 2.0
          %v841 = vmul.f32 %v817, 2.0
          %v845 = vrot.slane %v839, 1
          %v846 = vrot.slane %v840, 1
          %v847 = vsel %vm662, %v845, %v846
          %v848 = vrot.slane %v841, 1
          %v849 = vsel %vm662, %v846, %v848
          %v853 = vadd.f32 %v815, %v847
          %v854 = vadd.f32 %v816, %v849
          %v855 = vadd.f32 %v817, %v848
          %v859 = vrot.slane %v815, 2
          %v860 = vrot.slane %v816, 2
          %v861 = vsel %vm677, %v859, %v860
          %v862 = vrot.slane %v817, 2
          %v863 = vsel %vm677, %v860, %v862
          %v867 = vadd.f32 %v853, %v861
          %v868 = vadd.f32 %v854, %v863
          %v869 = vadd.f32 %v855, %v862
          %v873 = vrot.slane %v836, 2
          %v874 = vrot.slane %v837, 2
          %v875 = vsel %vm677, %v873, %v874
          %v876 = vrot.slane %v838, 2
          %v877 = vsel %vm677, %v874, %v876
          %v881 = vsub.f32 %v836, %v875
          %v882 = vsub.f32 %v837, %v877
          %v883 = vsub.f32 %v838, %v876
          %v884 = vsub.f32 %v792, %v800
          %v885 = vsub.f32 %v793, %v801
          %v886 = vsub.f32 %v794, %v802
          %v887 = vrot.slane %v796, 7
          %v888 = vrot.slane %v797, 7
          %v889 = vsel %vm706, %v887, %v888
          %v890 = vrot.slane %v798, 7
          %v891 = vsel %vm706, %v888, %v890
          %v895 = vadd.f32 %v884, %v887
          %v896 = vadd.f32 %v885, %v889
          %v897 = vadd.f32 %v886, %v891
          %898 = vrot.lane.b32.xlu0 %v796, 1
          %v899 = vpop.permute.xlu0 %898
          %900 = vrot.lane.b32.xlu0 %v797, 1
          %v901 = vpop.permute.xlu0 %900
          %902 = vrot.lane.b32.xlu0 %v798, 1
          %v903 = vpop.permute.xlu0 %902
          %v907 = vadd.f32 %v895, %v899
          %v908 = vadd.f32 %v896, %v901
          %v909 = vadd.f32 %v897, %v903
          %v910 = vadd.f32 %v907, %v818
          %v911 = vadd.f32 %v908, %v819
          %v912 = vadd.f32 %v909, %v820
          %913 = vrot.lane.b32.xlu0 %v796, 127
          %v914 = vpop.permute.xlu0 %913
          %915 = vrot.lane.b32.xlu0 %v797, 127
          %v916 = vpop.permute.xlu0 %915
          %917 = vrot.lane.b32.xlu0 %v798, 127
          %v918 = vpop.permute.xlu0 %917
          %v922 = vadd.f32 %v910, %v914
          %v923 = vadd.f32 %v911, %v916
          %v924 = vadd.f32 %v912, %v918
          %v925 = vrot.slane %v796, 1
          %v926 = vrot.slane %v797, 1
          %v927 = vsel %vm662, %v925, %v926
          %v928 = vrot.slane %v798, 1
          %v929 = vsel %vm662, %v926, %v928
          %v933 = vadd.f32 %v922, %v927
          %v934 = vadd.f32 %v923, %v929
          %v935 = vadd.f32 %v924, %v928
          %v936 = vand.u32 2147483647, %v867
          %v937 = vand.u32 2147483647, %v868
          %v938 = vand.u32 2147483647, %v869
          %v939 = vand.u32 2147483647, %v881
          %v940 = vand.u32 2147483647, %v882
          %v941 = vand.u32 2147483647, %v883
          %v942 = vadd.f32 %v936, %v939
          %v943 = vadd.f32 %v937, %v940
          %v944 = vadd.f32 %v938, %v941
          %v945 = vand.u32 2147483647, %v933
          %v946 = vand.u32 2147483647, %v934
          %v947 = vand.u32 2147483647, %v935
          %v951 = vrot.slane %v945, 1
          %v952 = vrot.slane %v946, 1
          %v953 = vsel %vm662, %v951, %v952
          %v954 = vrot.slane %v947, 1
          %v955 = vsel %vm662, %v952, %v954
          %956 = vrot.lane.b32.xlu0 %v953, 127
          %v957 = vpop.permute.xlu0 %956
          %958 = vrot.lane.b32.xlu0 %v955, 127
          %v959 = vpop.permute.xlu0 %958
          %960 = vrot.lane.b32.xlu0 %v954, 127
          %v961 = vpop.permute.xlu0 %960
          %v965 = vadd.f32 %v942, %v957
          %v966 = vadd.f32 %v943, %v959
          %v967 = vadd.f32 %v944, %v961
          %v968 = vmul.f32 %v965, 0.33333334
          %v969 = vmul.f32 %v966, 0.33333334
          %v970 = vmul.f32 %v967, 0.33333334
          %v971 = vsub.f32 %v788, %v968
          %v972 = vsub.f32 %v789, %v969
          %v973 = vsub.f32 %v790, %v970
          %v974 = vmul.f32 %v971, %v971
          %v975 = vmul.f32 %v972, %v972
          %v976 = vmul.f32 %v973, %v973
          %vm977 = vcmask 146432
          %v978 = vsel %vm977, %v974, 0.0
          %v979 = vsel %vm977, %v975, 0.0
          %v980 = vadd.f32 %v978, %v979
          %vm981 = vcmask 140288
          %v982 = vsel %vm981, %v976, 0.0
          %v983 = vadd.f32 %v980, %v982
          %v984 = vrot.slane %v983, 4
          %v985 = vadd.f32 %v983, %v984
          %v986 = vrot.slane %v985, 2
          %v987 = vadd.f32 %v985, %v986
          %v988 = vrot.slane %v987, 1
          %v989 = vadd.f32 %v987, %v988
          %v990 = vsel %vm977, %v989, 0.0
          %v991 = vld [vmem:[%s302 + $0x4] sm:$0x1]
          %v992 = vadd.f32 %v991, %v990
          %993 = vst [vmem:[%s302 + $0x4] sm:$0x1] %v992
        $region56: #{dc_and_bce_loss.1} parent=27 // pred_fallthru
          _
        %p994 = scmp.lt.s32.totalorder %s23, 1
        %s995 = scalar_select %p994, %s23, 1
        %s996 = smul.addr %s995, 8
        %s997 = scalar_lea.vmem %s2, %s996
        // Predicated region
        $region57: #{dc_and_bce_loss.1} parent=27 // pred_check
          %p998 = pneg %p133
        $region58: #{dc_and_bce_loss.1} parent=27 // pred_check_branch
          %1000 = sbr.rel (%p998) target = $region60
        $region59: #{dc_and_bce_loss.1} parent=27 // pred_region
          _
        $region60: #{dc_and_bce_loss.1} parent=27 // pred_fallthru
          _
      $region28: #{dc_and_bce_loss.1} parent=5 // pred_fallthru
        _
      %p1001 = scmp.le.s32.totalorder 2, %s14
      // Predicated region
      $region61: #{dc_and_bce_loss.1} parent=5 // pred_check
        %p1002 = pneg %p1001
      $region62: #{dc_and_bce_loss.1} parent=5 // pred_check_branch
        %1004 = sbr.rel (%p1002) target = $region64
      $region63: #{dc_and_bce_loss.1} parent=5 // pred_region
        %s1005 = ssub.s32 %s14, 2
        // Predicated region
        $region65: #{dc_and_bce_loss.1} parent=63 // pred_check
          %p1006 = pneg %p139
        $region66: #{dc_and_bce_loss.1} parent=63 // pred_check_branch
          %1008 = sbr.rel (%p1006) target = $region68
        $region67: #{dc_and_bce_loss.1} parent=63 // pred_region
          %p1009 = scmp.lt.s32.totalorder %s25, 1
          %s1010 = scalar_select %p1009, %s25, 1
          %s1011 = smul.addr %s1010, 8
          %s1012 = scalar_lea.vmem %s2, %s1011
        $region68: #{dc_and_bce_loss.1} parent=63 // pred_fallthru
          _
      $region64: #{dc_and_bce_loss.1} parent=5 // pred_fallthru
        _
    $region6: #{dc_and_bce_loss.1} parent=1 // loop_footer
      %s18 = sadd.s32 1, %s14
    $region7: #{dc_and_bce_loss.1} parent=1 // loop_footer_branch
      %13 = sbr.rel target = $region3
    $region8: #{dc_and_bce_loss.1} parent=1 // loop_exit
      _
    %1013 = vsyncpa [#allocation5], 1
    %s1014 = scalar_lea.sflag [#allocation5], 1
    %1015 = vsyncpa %s1014, 1
    %1016 = vsyncpa [#allocation7], 1
    %s1017 = scalar_lea.sflag [#allocation7], 1
    %1018 = vsyncpa %s1017, 1

</llo_original>
